<compile_context>
chip_gen: v7x
topology: tpu7x:2x2x1
jax: 0.10.0
libtpu: 0.0.40
codegen_flags: <defaults>
</compile_context>

<pallas_src>
import jax
import jax.numpy as jnp
from jax.experimental import pallas as pl
from jax.experimental.pallas import tpu as pltpu

LEAKY_SLOPE = 0.01          # torch.nn.LeakyReLU default
BN_EPS = 1e-5               # torch.nn.BatchNorm1d default
IN_DIM = 784
IN_DIM_PAD = 896            # 7 * 128 -> lane-dense K for the first (largest) GEMM
HIDDEN_DIMS = [512, 256, 128, 128]
LANE = 128
SUBLANE_BF16 = 16           # bf16 packed sublane tile is (16, 128)
VMEM_LIMIT_BYTES = 48 * 1024 * 1024   # > 16/32 MiB scoped defaults, < physical on all gens


def _round_up(x, m):
    return (x + m - 1) // m * m


# ----------------------------------------------------------------------------
# Kernels
# ----------------------------------------------------------------------------
def make_layer_kernel(tb, n_valid, need_mask, apply_prev_bn):
    """Fused kernel for one step of the pipeline.

    If apply_prev_bn: applies the previous layer's folded BN scale/shift +
    LeakyReLU to its bf16 pre-activation tile (all in VMEM / registers), then
    runs this layer's Linear (bf16 MXU, f32 accumulation) and accumulates the
    full-batch BN statistics across tiles. On the last batch tile it finalizes
    this layer's folded BN scale/shift.
    """
    inv_n = 1.0 / float(n_valid)

    def linear_and_stats(i, h_bf16, w_ref, g_ref, t_ref,
                         y_out_ref, s_out_ref, c_out_ref, sum_ref, sq_ref):
        last = pl.num_programs(0) - 1

        @pl.when(i == 0)
        def _():
            sum_ref[...] = jnp.zeros_like(sum_ref)
            sq_ref[...] = jnp.zeros_like(sq_ref)

        # Linear on the MXU: bf16 operands, f32 accumulation. (Bias omitted:
        # exactly cancelled by the training-mode BN mean subtraction.)
        y = jnp.dot(h_bf16, w_ref[...], preferred_element_type=jnp.float32)
        # Inter-layer activation stored in bf16: halves the dominant HBM traffic.
        y_out_ref[...] = y.astype(jnp.bfloat16)

        ones_row = jnp.ones((1, tb), jnp.float32)

        def accumulate(ym):
            # Row-sum on the MXU (idle slack) instead of the VPU/XLU; only the
            # square + its reduction stay on the vector units.
            sum_ref[...] += jnp.dot(ones_row, ym, preferred_element_type=jnp.float32)
            sq_ref[...] += jnp.sum(ym * ym, axis=0, keepdims=True)

        if need_mask:
            # Padded batch rows only exist in the final tile: keep the
            # steady-state loop mask-free, mask only the boundary tile.
            @pl.when(i < last)
            def _():
                accumulate(y)

            @pl.when(i == last)
            def _():
                rows = jax.lax.broadcasted_iota(jnp.int32, (tb, 1), 0) + i * tb
                accumulate(jnp.where(rows < n_valid, y, 0.0))
        else:
            accumulate(y)

        @pl.when(i == last)
        def _():
            mean = sum_ref[...] * inv_n
            var = jnp.maximum(sq_ref[...] * inv_n - mean * mean, 0.0)
            s = g_ref[...] * jax.lax.rsqrt(var + BN_EPS)
            s_out_ref[...] = s
            c_out_ref[...] = t_ref[...] - mean * s

    if apply_prev_bn:
        def kernel(y_ref, s_ref, c_ref, w_ref, g_ref, t_ref,
                   y_out_ref, s_out_ref, c_out_ref, sum_ref, sq_ref):
            i = pl.program_id(0)
            # Previous layer's BatchNorm (folded scale/shift, f32) + LeakyReLU.
            z = y_ref[...].astype(jnp.float32) * s_ref[...] + c_ref[...]
            h = jnp.where(z > 0, z, LEAKY_SLOPE * z).astype(jnp.bfloat16)
            linear_and_stats(i, h, w_ref, g_ref, t_ref,
                             y_out_ref, s_out_ref, c_out_ref, sum_ref, sq_ref)
    else:
        def kernel(x_ref, w_ref, g_ref, t_ref,
                   y_out_ref, s_out_ref, c_out_ref, sum_ref, sq_ref):
            i = pl.program_id(0)
            linear_and_stats(i, x_ref[...], w_ref, g_ref, t_ref,
                             y_out_ref, s_out_ref, c_out_ref, sum_ref, sq_ref)

    return kernel


# ----------------------------------------------------------------------------
# pallas_call wrapper
# ----------------------------------------------------------------------------
def _run_layer(args, *, tb, b_pad, k, n, n_valid, apply_prev_bn):
    need_mask = (b_pad != n_valid)
    kernel = make_layer_kernel(tb, n_valid, need_mask, apply_prev_bn)
    num_tiles = b_pad // tb

    act_spec = pl.BlockSpec((tb, k), lambda i: (i, 0))    # batch-tiled activation (bf16)
    vec_k = pl.BlockSpec((1, k), lambda i: (0, 0))        # resident s/c of prev layer
    # Grid-invariant operands (constant index_map): Mosaic keeps them resident;
    # worst case they're double-buffered (~1.75 MB for the largest bf16 weight).
    w_spec = pl.BlockSpec((k, n), lambda i: (0, 0))       # resident weight (bf16)
    vec_n = pl.BlockSpec((1, n), lambda i: (0, 0))        # resident gamma/beta -> s/c

    if apply_prev_bn:
        in_specs = [act_spec, vec_k, vec_k, w_spec, vec_n, vec_n]
    else:
        in_specs = [act_spec, w_spec, vec_n, vec_n]

    out_shape = (jax.ShapeDtypeStruct((b_pad, n), jnp.bfloat16),  # pre-BN y (bf16)
                 jax.ShapeDtypeStruct((1, n), jnp.float32),       # folded scale
                 jax.ShapeDtypeStruct((1, n), jnp.float32))       # folded shift
    out_specs = (pl.BlockSpec((tb, n), lambda i: (i, 0)), vec_n, vec_n)

    return pl.pallas_call(
        kernel,
        grid=(num_tiles,),
        in_specs=in_specs,
        out_specs=out_specs,
        out_shape=out_shape,
        scratch_shapes=[pltpu.VMEM((1, n), jnp.float32),   # sum accumulator
                        pltpu.VMEM((1, n), jnp.float32)],  # sum-of-squares accumulator
        compiler_params=pltpu.CompilerParams(
            # "arbitrary": BN statistics accumulate sequentially across batch
            # tiles so full-batch BN stays exact (not per-tile / per-core).
            dimension_semantics=("arbitrary",),
            vmem_limit_bytes=VMEM_LIMIT_BYTES),
    )(*args)


# ----------------------------------------------------------------------------
# Parameters
# ----------------------------------------------------------------------------
def init_params(key, latent_dim):
    """PyTorch-shaped parameters mirroring nn.Linear / nn.BatchNorm1d init."""
    dims = [IN_DIM] + HIDDEN_DIMS + [latent_dim]
    params = []
    for i in range(len(dims) - 1):
        key, k_w, k_b = jax.random.split(key, 3)
        fan_in, fan_out = dims[i], dims[i + 1]
        bound = 1.0 / float(fan_in) ** 0.5
        w = jax.random.uniform(k_w, (fan_in, fan_out), jnp.float32, -bound, bound)
        b = jax.random.uniform(k_b, (fan_out,), jnp.float32, -bound, bound)
        gamma = jnp.ones((fan_out,), jnp.float32)
        beta = jnp.zeros((fan_out,), jnp.float32)
        params.append((w, b, gamma, beta))
    return params


def prepare_params(params, latent_dim):
    """Kernel-side parameters: lane-dense padding, bf16 weights, bias dropped."""
    latent_pad = _round_up(latent_dim, LANE)
    prepped = []
    for idx, (w, b, gamma, beta) in enumerate(params):
        del b  # exact no-op under training-mode BN (mean subtraction cancels it)
        if idx == 0:
            w = jnp.pad(w, ((0, IN_DIM_PAD - IN_DIM), (0, 0)))      # 784 -> 896, zeros
        if idx == len(params) - 1:
            pad_n = latent_pad - latent_dim
            w = jnp.pad(w, ((0, 0), (0, pad_n)))                    # lane-dense output
            gamma = jnp.pad(gamma, (0, pad_n), constant_values=1.0)
            beta = jnp.pad(beta, (0, pad_n))
        prepped.append((w.astype(jnp.bfloat16),
                        gamma.reshape(1, -1).astype(jnp.float32),
                        beta.reshape(1, -1).astype(jnp.float32)))
    return prepped


# ----------------------------------------------------------------------------
# Forward pass
# ----------------------------------------------------------------------------
def bm_encoder(x, prepped_params, latent_dim, *, tile_batch=1024):
    x2 = jnp.asarray(x, jnp.float32).reshape(-1, IN_DIM)
    b = x2.shape[0]

    # Batch tile: multiple of 16 (bf16 packed sublane tile), capped so every
    # tile fits comfortably in scoped VMEM on v5e/v6e/v7x.
    tb = min(_round_up(tile_batch, SUBLANE_BF16), _round_up(b, SUBLANE_BF16))
    b_pad = _round_up(b, tb)

    # Zero-pad: features 784 -> 896 (lane-dense K) and batch -> b_pad; cast to bf16.
    x_pad = jnp.zeros((b_pad, IN_DIM_PAD), jnp.bfloat16)
    x_pad = x_pad.at[:b, :IN_DIM].set(x2.astype(jnp.bfloat16))

    # Block 1: Linear + full-batch BN statistics.
    w, g, t = prepped_params[0]
    y, s, c = _run_layer((x_pad, w, g, t), tb=tb, b_pad=b_pad,
                         k=IN_DIM_PAD, n=w.shape[1], n_valid=b, apply_prev_bn=False)

    # Blocks 2..5: fused [BN + LeakyReLU of previous block] + [Linear + BN stats].
    for w, g, t in prepped_params[1:]:
        y, s, c = _run_layer((y, s, c, w, g, t), tb=tb, b_pad=b_pad,
                             k=y.shape[1], n=w.shape[1], n_valid=b,
                             apply_prev_bn=True)

    # Final BN + Tanh: pure elementwise affine + tanh on only the valid rows /
    # latent columns — done in the wrapper (XLA fuses it), saving a kernel launch
    # and the 4x unused f32 column writes when latent_dim << 128.
    y_valid = y[:b, :latent_dim].astype(jnp.float32)
    return jnp.tanh(y_valid * s[0, :latent_dim] + c[0, :latent_dim])


def bm_encoder_reference(x, params):
    """Pure-JAX f32 reference of the PyTorch module (training-mode BN, with bias)."""
    h = jnp.asarray(x, jnp.float32).reshape(-1, IN_DIM)
    n_layers = len(params)
    for idx, (w, b, gamma, beta) in enumerate(params):
        y = h @ w + b
        mean = jnp.mean(y, axis=0, keepdims=True)
        var = jnp.mean(jnp.square(y - mean), axis=0, keepdims=True)
        y = (y - mean) * jax.lax.rsqrt(var + BN_EPS) * gamma + beta
        h = jnp.where(y > 0, y, LEAKY_SLOPE * y) if idx < n_layers - 1 else jnp.tanh(y)
    return h


if __name__ == "__main__":
    latent_dim = 32
    key = jax.random.PRNGKey(0)
    key, k_x = jax.random.split(key)

    # Small MNIST-like batch: (B, 1, 28, 28), flattened to (B, 784) in the wrapper.
    x = jax.random.normal(k_x, (8, 1, 28, 28), jnp.float32)
    params = init_params(jax.random.PRNGKey(0), latent_dim)
    prepped = prepare_params(params, latent_dim)

    out = bm_encoder(x, prepped, latent_dim)
    out = jax.block_until_ready(out)

    assert out.shape == (8, latent_dim)
    assert bool(jnp.all(jnp.isfinite(out)))
    assert bool(jnp.all(jnp.abs(out) <= 1.0 + 1e-6))   # tanh range

    # Check against the f32 reference (loose tolerance: bf16 matmuls + bf16 y).
    ref = bm_encoder_reference(x, params)
    max_diff = float(jnp.max(jnp.abs(out - ref)))
    assert max_diff < 0.25, f"kernel/reference mismatch: max |diff| = {max_diff}"

    print("KERNEL_OK")
</pallas_src>

<mosaic_0001>
module attributes {stable_mosaic.version = 11 : i64} {
  func.func @kernel(%arg0: i32, %arg1: memref<16x896xbf16, #tpu.memory_space<vmem>>, %arg2: memref<896x512xbf16, #tpu.memory_space<vmem>>, %arg3: memref<1x512xf32, #tpu.memory_space<vmem>>, %arg4: memref<1x512xf32, #tpu.memory_space<vmem>>, %arg5: memref<16x512xbf16, #tpu.memory_space<vmem>>, %arg6: memref<1x512xf32, #tpu.memory_space<vmem>>, %arg7: memref<1x512xf32, #tpu.memory_space<vmem>>, %arg8: memref<1x512xf32, #tpu.memory_space<vmem>>, %arg9: memref<1x512xf32, #tpu.memory_space<vmem>>) attributes {dimension_semantics = [#tpu.dimension_semantics<arbitrary>], iteration_bounds = array<i64: 1>, scalar_prefetch = 0 : i64, scratch_operands = 2 : i64, tpu.core_type = #tpu.core_type<tc>, window_params = [{transform_indices = @transform_0, window_bounds = array<i64: 16, 896>}, {pipeline_mode = #tpu.pipeline_mode<synchronous>, transform_indices = @transform_1, window_bounds = array<i64: 896, 512>}, {pipeline_mode = #tpu.pipeline_mode<synchronous>, transform_indices = @transform_2, window_bounds = array<i64: 1, 512>}, {pipeline_mode = #tpu.pipeline_mode<synchronous>, transform_indices = @transform_3, window_bounds = array<i64: 1, 512>}, {transform_indices = @transform_4, window_bounds = array<i64: 16, 512>}, {pipeline_mode = #tpu.pipeline_mode<synchronous>, transform_indices = @transform_5, window_bounds = array<i64: 1, 512>}, {pipeline_mode = #tpu.pipeline_mode<synchronous>, transform_indices = @transform_6, window_bounds = array<i64: 1, 512>}]} {
    %c0 = arith.constant 0 : index
    %c0_0 = arith.constant 0 : index
    %0 = vector.load %arg1[%c0, %c0_0] : memref<16x896xbf16, #tpu.memory_space<vmem>>, vector<16x896xbf16>
    %c0_i32 = arith.constant 0 : i32
    %1 = arith.cmpi eq, %arg0, %c0_i32 : i32
    %2 = arith.extui %1 : i1 to i32
    %c0_i32_1 = arith.constant 0 : i32
    %3 = arith.cmpi ne, %2, %c0_i32_1 : i32
    scf.if %3 {
      %cst_13 = arith.constant 0.000000e+00 : f32
      %18 = vector.broadcast %cst_13 : f32 to vector<1x512xf32>
      %c0_14 = arith.constant 0 : index
      %c0_15 = arith.constant 0 : index
      %19 = vector.load %arg8[%c0_14, %c0_15] : memref<1x512xf32, #tpu.memory_space<vmem>>, vector<1x512xf32>
      tpu.vector_store %arg8[%c0_14, %c0_15], %18 {strides = array<i32>} : memref<1x512xf32, #tpu.memory_space<vmem>>, vector<1x512xf32>,
      %cst_16 = arith.constant 0.000000e+00 : f32
      %20 = vector.broadcast %cst_16 : f32 to vector<1x512xf32>
      %c0_17 = arith.constant 0 : index
      %c0_18 = arith.constant 0 : index
      %21 = vector.load %arg9[%c0_17, %c0_18] : memref<1x512xf32, #tpu.memory_space<vmem>>, vector<1x512xf32>
      tpu.vector_store %arg9[%c0_17, %c0_18], %20 {strides = array<i32>} : memref<1x512xf32, #tpu.memory_space<vmem>>, vector<1x512xf32>,
    } else {
    }
    %c0_2 = arith.constant 0 : index
    %c0_3 = arith.constant 0 : index
    %4 = vector.load %arg2[%c0_2, %c0_3] : memref<896x512xbf16, #tpu.memory_space<vmem>>, vector<896x512xbf16>
    %cst = arith.constant dense<0.000000e+00> : vector<16x512xf32>
    %5 = tpu.matmul %0, %4, %cst {dimension_numbers = #tpu.dot_dimension_numbers<[1], [0], [0], [1], [0, 0, 1, 1], [], []>} : vector<16x896xbf16>, vector<896x512xbf16>, vector<16x512xf32> -> vector<16x512xf32>
    %6 = arith.truncf %5 : vector<16x512xf32> to vector<16x512xbf16>
    %c0_4 = arith.constant 0 : index
    %c0_5 = arith.constant 0 : index
    %7 = vector.load %arg5[%c0_4, %c0_5] : memref<16x512xbf16, #tpu.memory_space<vmem>>, vector<16x512xbf16>
    tpu.vector_store %arg5[%c0_4, %c0_5], %6 {strides = array<i32>} : memref<16x512xbf16, #tpu.memory_space<vmem>>, vector<16x512xbf16>,
    %cst_6 = arith.constant 1.000000e+00 : f32
    %8 = vector.broadcast %cst_6 : f32 to vector<1x16xf32>
    %c0_i32_7 = arith.constant 0 : i32
    %9 = arith.cmpi slt, %arg0, %c0_i32_7 : i32
    %10 = arith.extui %9 : i1 to i32
    %c0_i32_8 = arith.constant 0 : i32
    %11 = arith.cmpi ne, %10, %c0_i32_8 : i32
    scf.if %11 {
      %c0_13 = arith.constant 0 : index
      %c0_14 = arith.constant 0 : index
      %18 = vector.load %arg8[%c0_13, %c0_14] : memref<1x512xf32, #tpu.memory_space<vmem>>, vector<1x512xf32>
      %cst_15 = arith.constant dense<0.000000e+00> : vector<1x512xf32>
      %19 = tpu.matmul %8, %5, %cst_15 {dimension_numbers = #tpu.dot_dimension_numbers<[1], [0], [0], [1], [0, 0, 1, 1], [], []>} : vector<1x16xf32>, vector<16x512xf32>, vector<1x512xf32> -> vector<1x512xf32>
      %20 = arith.addf %18, %19 : vector<1x512xf32>
      %c0_16 = arith.constant 0 : index
      %c0_17 = arith.constant 0 : index
      %21 = vector.load %arg8[%c0_16, %c0_17] : memref<1x512xf32, #tpu.memory_space<vmem>>, vector<1x512xf32>
      tpu.vector_store %arg8[%c0_16, %c0_17], %20 {strides = array<i32>} : memref<1x512xf32, #tpu.memory_space<vmem>>, vector<1x512xf32>,
      %c0_18 = arith.constant 0 : index
      %c0_19 = arith.constant 0 : index
      %22 = vector.load %arg9[%c0_18, %c0_19] : memref<1x512xf32, #tpu.memory_space<vmem>>, vector<1x512xf32>
      %23 = arith.mulf %5, %5 : vector<16x512xf32>
      %cst_20 = arith.constant dense<0.000000e+00> : vector<512xf32>
      %24 = vector.multi_reduction <add>, %23, %cst_20 [0] : vector<16x512xf32> to vector<512xf32>
      %25 = vector.shape_cast %24 : vector<512xf32> to vector<1x512xf32>
      %26 = arith.addf %22, %25 : vector<1x512xf32>
      %c0_21 = arith.constant 0 : index
      %c0_22 = arith.constant 0 : index
      %27 = vector.load %arg9[%c0_21, %c0_22] : memref<1x512xf32, #tpu.memory_space<vmem>>, vector<1x512xf32>
      tpu.vector_store %arg9[%c0_21, %c0_22], %26 {strides = array<i32>} : memref<1x512xf32, #tpu.memory_space<vmem>>, vector<1x512xf32>,
    } else {
    }
    %c0_i32_9 = arith.constant 0 : i32
    %12 = arith.cmpi eq, %arg0, %c0_i32_9 : i32
    %13 = arith.extui %12 : i1 to i32
    %c0_i32_10 = arith.constant 0 : i32
    %14 = arith.cmpi ne, %13, %c0_i32_10 : i32
    scf.if %14 {
      %18 = tpu.iota {dimensions = array<i32: 0>} : vector<16x1xi32>
      %c16_i32 = arith.constant 16 : i32
      %19 = arith.muli %arg0, %c16_i32 : i32
      %20 = vector.broadcast %19 : i32 to vector<16x1xi32>
      %21 = arith.addi %18, %20 : vector<16x1xi32>
      %c8_i32 = arith.constant 8 : i32
      %22 = vector.broadcast %c8_i32 : i32 to vector<16x1xi32>
      %23 = arith.cmpi slt, %21, %22 : vector<16x1xi32>
      %cst_13 = arith.constant 0.000000e+00 : f32
      %24 = vector.shape_cast %23 : vector<16x1xi1> to vector<16x1xi1>
      %25 = vector.broadcast %24 : vector<16x1xi1> to vector<16x512xi1>
      %26 = vector.broadcast %cst_13 : f32 to vector<16x512xf32>
      %27 = arith.select %25, %5, %26 : vector<16x512xi1>, vector<16x512xf32>
      %c0_14 = arith.constant 0 : index
      %c0_15 = arith.constant 0 : index
      %28 = vector.load %arg8[%c0_14, %c0_15] : memref<1x512xf32, #tpu.memory_space<vmem>>, vector<1x512xf32>
      %cst_16 = arith.constant dense<0.000000e+00> : vector<1x512xf32>
      %29 = tpu.matmul %8, %27, %cst_16 {dimension_numbers = #tpu.dot_dimension_numbers<[1], [0], [0], [1], [0, 0, 1, 1], [], []>} : vector<1x16xf32>, vector<16x512xf32>, vector<1x512xf32> -> vector<1x512xf32>
      %30 = arith.addf %28, %29 : vector<1x512xf32>
      %c0_17 = arith.constant 0 : index
      %c0_18 = arith.constant 0 : index
      %31 = vector.load %arg8[%c0_17, %c0_18] : memref<1x512xf32, #tpu.memory_space<vmem>>, vector<1x512xf32>
      tpu.vector_store %arg8[%c0_17, %c0_18], %30 {strides = array<i32>} : memref<1x512xf32, #tpu.memory_space<vmem>>, vector<1x512xf32>,
      %c0_19 = arith.constant 0 : index
      %c0_20 = arith.constant 0 : index
      %32 = vector.load %arg9[%c0_19, %c0_20] : memref<1x512xf32, #tpu.memory_space<vmem>>, vector<1x512xf32>
      %33 = arith.mulf %27, %27 : vector<16x512xf32>
      %cst_21 = arith.constant dense<0.000000e+00> : vector<512xf32>
      %34 = vector.multi_reduction <add>, %33, %cst_21 [0] : vector<16x512xf32> to vector<512xf32>
      %35 = vector.shape_cast %34 : vector<512xf32> to vector<1x512xf32>
      %36 = arith.addf %32, %35 : vector<1x512xf32>
      %c0_22 = arith.constant 0 : index
      %c0_23 = arith.constant 0 : index
      %37 = vector.load %arg9[%c0_22, %c0_23] : memref<1x512xf32, #tpu.memory_space<vmem>>, vector<1x512xf32>
      tpu.vector_store %arg9[%c0_22, %c0_23], %36 {strides = array<i32>} : memref<1x512xf32, #tpu.memory_space<vmem>>, vector<1x512xf32>,
    } else {
    }
    %c0_i32_11 = arith.constant 0 : i32
    %15 = arith.cmpi eq, %arg0, %c0_i32_11 : i32
    %16 = arith.extui %15 : i1 to i32
    %c0_i32_12 = arith.constant 0 : i32
    %17 = arith.cmpi ne, %16, %c0_i32_12 : i32
    scf.if %17 {
      %c0_13 = arith.constant 0 : index
      %c0_14 = arith.constant 0 : index
      %18 = vector.load %arg8[%c0_13, %c0_14] : memref<1x512xf32, #tpu.memory_space<vmem>>, vector<1x512xf32>
      %cst_15 = arith.constant 1.250000e-01 : f32
      %19 = vector.broadcast %cst_15 : f32 to vector<1x512xf32>
      %20 = arith.mulf %18, %19 : vector<1x512xf32>
      %c0_16 = arith.constant 0 : index
      %c0_17 = arith.constant 0 : index
      %21 = vector.load %arg9[%c0_16, %c0_17] : memref<1x512xf32, #tpu.memory_space<vmem>>, vector<1x512xf32>
      %cst_18 = arith.constant 1.250000e-01 : f32
      %22 = vector.broadcast %cst_18 : f32 to vector<1x512xf32>
      %23 = arith.mulf %21, %22 : vector<1x512xf32>
      %24 = arith.mulf %20, %20 : vector<1x512xf32>
      %25 = arith.subf %23, %24 : vector<1x512xf32>
      %cst_19 = arith.constant 0.000000e+00 : f32
      %26 = vector.broadcast %cst_19 : f32 to vector<1x512xf32>
      %27 = arith.maximumf %25, %26 : vector<1x512xf32>
      %c0_20 = arith.constant 0 : index
      %c0_21 = arith.constant 0 : index
      %28 = vector.load %arg3[%c0_20, %c0_21] : memref<1x512xf32, #tpu.memory_space<vmem>>, vector<1x512xf32>
      %cst_22 = arith.constant 9.99999974E-6 : f32
      %29 = vector.broadcast %cst_22 : f32 to vector<1x512xf32>
      %30 = arith.addf %27, %29 : vector<1x512xf32>
      %31 = math.rsqrt %30 : vector<1x512xf32>
      %32 = arith.mulf %28, %31 : vector<1x512xf32>
      %c0_23 = arith.constant 0 : index
      %c0_24 = arith.constant 0 : index
      %33 = vector.load %arg6[%c0_23, %c0_24] : memref<1x512xf32, #tpu.memory_space<vmem>>, vector<1x512xf32>
      tpu.vector_store %arg6[%c0_23, %c0_24], %32 {strides = array<i32>} : memref<1x512xf32, #tpu.memory_space<vmem>>, vector<1x512xf32>,
      %c0_25 = arith.constant 0 : index
      %c0_26 = arith.constant 0 : index
      %34 = vector.load %arg4[%c0_25, %c0_26] : memref<1x512xf32, #tpu.memory_space<vmem>>, vector<1x512xf32>
      %35 = arith.mulf %20, %32 : vector<1x512xf32>
      %36 = arith.subf %34, %35 : vector<1x512xf32>
      %c0_27 = arith.constant 0 : index
      %c0_28 = arith.constant 0 : index
      %37 = vector.load %arg7[%c0_27, %c0_28] : memref<1x512xf32, #tpu.memory_space<vmem>>, vector<1x512xf32>
      tpu.vector_store %arg7[%c0_27, %c0_28], %36 {strides = array<i32>} : memref<1x512xf32, #tpu.memory_space<vmem>>, vector<1x512xf32>,
    } else {
    }
    return
  }
  func.func @transform_0(%arg0: i32) -> (i32, i32) {
    %c0_i32 = arith.constant 0 : i32
    %c0_i32_0 = arith.constant 0 : i32
    return %arg0, %c0_i32 : i32, i32
  }
  func.func @transform_1(%arg0: i32) -> (i32, i32) {
    %c0_i32 = arith.constant 0 : i32
    %c0_i32_0 = arith.constant 0 : i32
    %c0_i32_1 = arith.constant 0 : i32
    return %c0_i32, %c0_i32_0 : i32, i32
  }
  func.func @transform_2(%arg0: i32) -> (i32, i32) {
    %c0_i32 = arith.constant 0 : i32
    %c0_i32_0 = arith.constant 0 : i32
    %c0_i32_1 = arith.constant 0 : i32
    return %c0_i32, %c0_i32_0 : i32, i32
  }
  func.func @transform_3(%arg0: i32) -> (i32, i32) {
    %c0_i32 = arith.constant 0 : i32
    %c0_i32_0 = arith.constant 0 : i32
    %c0_i32_1 = arith.constant 0 : i32
    return %c0_i32, %c0_i32_0 : i32, i32
  }
  func.func @transform_4(%arg0: i32) -> (i32, i32) {
    %c0_i32 = arith.constant 0 : i32
    %c0_i32_0 = arith.constant 0 : i32
    return %arg0, %c0_i32 : i32, i32
  }
  func.func @transform_5(%arg0: i32) -> (i32, i32) {
    %c0_i32 = arith.constant 0 : i32
    %c0_i32_0 = arith.constant 0 : i32
    %c0_i32_1 = arith.constant 0 : i32
    return %c0_i32, %c0_i32_0 : i32, i32
  }
  func.func @transform_6(%arg0: i32) -> (i32, i32) {
    %c0_i32 = arith.constant 0 : i32
    %c0_i32_0 = arith.constant 0 : i32
    %c0_i32_1 = arith.constant 0 : i32
    return %c0_i32, %c0_i32_0 : i32, i32
  }
}

</mosaic_0001>

<llo_original>
// kernel: tpu_custom_call.1
$region0: #{tpu_custom_call.1}
  #allocation0 [shape = 'u32[]', space=smem, size = 0x4, offset = 0x4, fixed_abs, tag = 'smem constant byte address 0x4 - core index']
  #allocation1 [shape = 'u32[144,128]{1,0:T(1,128)}', space=vmem, size = 0x12000, scoped, tag = 'internal scratch']
  #allocation2 [shape = 'f32[1,512]{1,0:T(1,128)}', space=vmem, size = 0x800, scoped, tag = 'scratch operand']
  #allocation3 [shape = 'f32[1,512]{1,0:T(1,128)}', space=vmem, size = 0x800, scoped, tag = 'scratch operand']
  %s0 = inlined_call_operand.hbm [shape: bf16[16,896], index: 0, kind: input, shape index: {}]
  %s1 = inlined_call_operand.hbm [shape: bf16[896,512], index: 1, kind: input, shape index: {}]
  %s2 = inlined_call_operand.vmem [shape: f32[1,512], index: 2, kind: input, shape index: {}]
  %s3 = inlined_call_operand.vmem [shape: f32[1,512], index: 3, kind: input, shape index: {}]
  %s4 = inlined_call_operand.hbm [shape: bf16[16,512], index: 4, kind: output, shape index: {0}]
  %s5 = inlined_call_operand.hbm [shape: f32[1,512], index: 5, kind: output, shape index: {1}]
  %s6 = inlined_call_operand.hbm [shape: f32[1,512], index: 6, kind: output, shape index: {2}]
  %7 = xla_tuple %s4, %s5, %s6
  %s8 = sld [smem:[#allocation0]]
  $region62: #{tpu_custom_call.1} parent=0
    _
  %s10 = ssub.s32 1, %s8
  %s11 = scalar_select 0, %s10, %s8
  $region1: #{tpu_custom_call.1} parent=0
    #allocation4 [shape = 'u8[28672]{0}', space=vmem, size = 0x7000, scoped, tag = 'input window, operand 0, single buffered']
    #allocation5 [shape = 's32[1]{0}', space=sflag, size = 0x4, scoped, tag = 'scoped memory for tpu_custom_call.1']
    #allocation6 [shape = 's32[1]{0}', space=sflag, size = 0x4, scoped, tag = 'scoped memory for tpu_custom_call.1']
    #allocation7 [shape = 'u8[917504]{0}', space=vmem, size = 0xe0000, scoped, tag = 'input window, operand 1, single buffered']
    #allocation8 [shape = 's32[1]{0}', space=sflag, size = 0x4, scoped, tag = 'scoped memory for tpu_custom_call.1']
    #allocation9 [shape = 'u8[16384]{0}', space=vmem, size = 0x4000, scoped, tag = 'output window, operand 0, single buffered']
    #allocation10 [shape = 'u8[2048]{0}', space=vmem, size = 0x800, scoped, tag = 'output window, operand 1, single buffered']
    #allocation11 [shape = 's32[1]{0}', space=sflag, size = 0x4, scoped, tag = 'scoped memory for tpu_custom_call.1']
    #allocation12 [shape = 'u8[2048]{0}', space=vmem, size = 0x800, scoped, tag = 'output window, operand 2, single buffered']
    %12 = vsyncpa [#allocation5], 0
    %13 = vsyncpa [#allocation8], 0
    %14 = vsyncpa [#allocation6], 0
    %15 = vsyncpa [#allocation11], 0
    // Predicated region
    $region2: #{tpu_custom_call.1} parent=1 // pred_check
      _
    $region3: #{tpu_custom_call.1} parent=1 // pred_check_branch
      %17 = sbr.rel (0) target = $region5
    $region4: #{tpu_custom_call.1} parent=1 // pred_region
      %s19 = ssub.s32 896, 896
      %20 = vsyncadd [#allocation5], %s19
      %s21 = sshll.u32 [#allocation4], 4
      %s22 = int_to_ptr.vmem [resolvable:$true] %s21
      %27 = dma.hbm_to_vmem [thread:$0]  %s0, 896, %s22, [#allocation5], 448, 448, 28
    $region5: #{tpu_custom_call.1} parent=1 // pred_fallthru
      _
    // Predicated region
    $region6: #{tpu_custom_call.1} parent=1 // pred_check
      _
    $region7: #{tpu_custom_call.1} parent=1 // pred_check_branch
      %29 = sbr.rel (0) target = $region9
    $region8: #{tpu_custom_call.1} parent=1 // pred_region
      %s31 = ssub.s32 28672, 28672
      %32 = vsyncadd [#allocation8], %s31
      %s33 = sshll.u32 [#allocation7], 4
      %s34 = int_to_ptr.vmem [resolvable:$true] %s33
      %39 = dma.hbm_to_vmem [thread:$0]  %s1, 28672, %s34, [#allocation8], 256, 256, 16
    $region9: #{tpu_custom_call.1} parent=1 // pred_fallthru
      _
    // Predicated region
    $region10: #{tpu_custom_call.1} parent=1 // pred_check
      _
    $region11: #{tpu_custom_call.1} parent=1 // pred_check_branch
      %41 = sbr.rel (0) target = $region13
    $region12: #{tpu_custom_call.1} parent=1 // pred_region
      _
    $region13: #{tpu_custom_call.1} parent=1 // pred_fallthru
      _
    // Predicated region
    $region14: #{tpu_custom_call.1} parent=1 // pred_check
      _
    $region15: #{tpu_custom_call.1} parent=1 // pred_check_branch
      %43 = sbr.rel (0) target = $region17
    $region16: #{tpu_custom_call.1} parent=1 // pred_region
      _
    $region17: #{tpu_custom_call.1} parent=1 // pred_fallthru
      _
    // Predicated region
    $region18: #{tpu_custom_call.1} parent=1 // pred_check
      _
    $region19: #{tpu_custom_call.1} parent=1 // pred_check_branch
      %45 = sbr.rel (0) target = $region21
    $region20: #{tpu_custom_call.1} parent=1 // pred_region
      %46 = dma.done [#allocation5], 896
    $region21: #{tpu_custom_call.1} parent=1 // pred_fallthru
      _
    // Predicated region
    $region22: #{tpu_custom_call.1} parent=1 // pred_check
      _
    $region23: #{tpu_custom_call.1} parent=1 // pred_check_branch
      %48 = sbr.rel (0) target = $region25
    $region24: #{tpu_custom_call.1} parent=1 // pred_region
      %49 = dma.done [#allocation8], 28672
    $region25: #{tpu_custom_call.1} parent=1 // pred_fallthru
      _
    %v51 = vld [vmem:[#allocation4] sm:$0xff]
    %v52 = vld [vmem:[#allocation4 + $0x8] sm:$0xff]
    %v53 = vld [vmem:[#allocation4 + $0x10] sm:$0xff]
    %v54 = vld [vmem:[#allocation4 + $0x18] sm:$0xf]
    %v55 = vld [vmem:[#allocation4 + $0x1c] sm:$0xff]
    %v56 = vld [vmem:[#allocation4 + $0x24] sm:$0xff]
    %v57 = vld [vmem:[#allocation4 + $0x2c] sm:$0xff]
    %v58 = vld [vmem:[#allocation4 + $0x34] sm:$0xf]
    %p59 = scmp.eq.s32.totalorder 0, 0
    // Predicated region
    $region26: #{tpu_custom_call.1} parent=1 // pred_check
      %p60 = pneg %p59
    $region27: #{tpu_custom_call.1} parent=1 // pred_check_branch
      %62 = sbr.rel (%p60) target = $region29
    $region28: #{tpu_custom_call.1} parent=1 // pred_region
      %v63 = vlaneseq
      %vm64 = vcmp.ge.s32.totalorder %v63, 0
      %vm65 = vcmp.lt.s32.totalorder %v63, 512
      %vm66 = vmand %vm64, %vm65
      %67 = vst.msk [vmem:[#allocation2] sm:$0xf] %vm66, 0.0
      %68 = vst.msk [vmem:[#allocation3] sm:$0xf] %vm66, 0.0
    $region29: #{tpu_custom_call.1} parent=1 // pred_fallthru
      _
    %v69 = vld [vmem:[#allocation7] sm:$0xff]
    %v70 = vld [vmem:[#allocation7 + $0x8] sm:$0xff]
    %v71 = vld [vmem:[#allocation7 + $0x10] sm:$0xff]
    %v72 = vld [vmem:[#allocation7 + $0x18] sm:$0xff]
    %v73 = vld [vmem:[#allocation7 + $0x20] sm:$0xff]
    %v74 = vld [vmem:[#allocation7 + $0x28] sm:$0xff]
    %v75 = vld [vmem:[#allocation7 + $0x30] sm:$0xff]
    %v76 = vld [vmem:[#allocation7 + $0x38] sm:$0xff]
    %v77 = vld [vmem:[#allocation7 + $0x40] sm:$0xff]
    %v78 = vld [vmem:[#allocation7 + $0x48] sm:$0xff]
    %v79 = vld [vmem:[#allocation7 + $0x50] sm:$0xff]
    %v80 = vld [vmem:[#allocation7 + $0x58] sm:$0xff]
    %v81 = vld [vmem:[#allocation7 + $0x60] sm:$0xff]
    %v82 = vld [vmem:[#allocation7 + $0x68] sm:$0xff]
    %v83 = vld [vmem:[#allocation7 + $0x70] sm:$0xff]
    %v84 = vld [vmem:[#allocation7 + $0x78] sm:$0xff]
    %v85 = vld [vmem:[#allocation7 + $0x80] sm:$0xff]
    %v86 = vld [vmem:[#allocation7 + $0x88] sm:$0xff]
    %v87 = vld [vmem:[#allocation7 + $0x90] sm:$0xff]
    %v88 = vld [vmem:[#allocation7 + $0x98] sm:$0xff]
    %v89 = vld [vmem:[#allocation7 + $0xa0] sm:$0xff]
    %v90 = vld [vmem:[#allocation7 + $0xa8] sm:$0xff]
    %v91 = vld [vmem:[#allocation7 + $0xb0] sm:$0xff]
    %v92 = vld [vmem:[#allocation7 + $0xb8] sm:$0xff]
    %v93 = vld [vmem:[#allocation7 + $0xc0] sm:$0xff]
    %v94 = vld [vmem:[#allocation7 + $0xc8] sm:$0xff]
    %v95 = vld [vmem:[#allocation7 + $0xd0] sm:$0xff]
    %v96 = vld [vmem:[#allocation7 + $0xd8] sm:$0xff]
    %v97 = vld [vmem:[#allocation7 + $0xe0] sm:$0xff]
    %v98 = vld [vmem:[#allocation7 + $0xe8] sm:$0xff]
    %v99 = vld [vmem:[#allocation7 + $0xf0] sm:$0xff]
    %v100 = vld [vmem:[#allocation7 + $0xf8] sm:$0xff]
    %v101 = vld [vmem:[#allocation7 + $0x100] sm:$0xff]
    %v102 = vld [vmem:[#allocation7 + $0x108] sm:$0xff]
    %v103 = vld [vmem:[#allocation7 + $0x110] sm:$0xff]
    %v104 = vld [vmem:[#allocation7 + $0x118] sm:$0xff]
    %v105 = vld [vmem:[#allocation7 + $0x120] sm:$0xff]
    %v106 = vld [vmem:[#allocation7 + $0x128] sm:$0xff]
    %v107 = vld [vmem:[#allocation7 + $0x130] sm:$0xff]
    %v108 = vld [vmem:[#allocation7 + $0x138] sm:$0xff]
    %v109 = vld [vmem:[#allocation7 + $0x140] sm:$0xff]
    %v110 = vld [vmem:[#allocation7 + $0x148] sm:$0xff]
    %v111 = vld [vmem:[#allocation7 + $0x150] sm:$0xff]
    %v112 = vld [vmem:[#allocation7 + $0x158] sm:$0xff]
    %v113 = vld [vmem:[#allocation7 + $0x160] sm:$0xff]
    %v114 = vld [vmem:[#allocation7 + $0x168] sm:$0xff]
    %v115 = vld [vmem:[#allocation7 + $0x170] sm:$0xff]
    %v116 = vld [vmem:[#allocation7 + $0x178] sm:$0xff]
    %v117 = vld [vmem:[#allocation7 + $0x180] sm:$0xff]
    %v118 = vld [vmem:[#allocation7 + $0x188] sm:$0xff]
    %v119 = vld [vmem:[#allocation7 + $0x190] sm:$0xff]
    %v120 = vld [vmem:[#allocation7 + $0x198] sm:$0xff]
    %v121 = vld [vmem:[#allocation7 + $0x1a0] sm:$0xff]
    %v122 = vld [vmem:[#allocation7 + $0x1a8] sm:$0xff]
    %v123 = vld [vmem:[#allocation7 + $0x1b0] sm:$0xff]
    %v124 = vld [vmem:[#allocation7 + $0x1b8] sm:$0xff]
    %v125 = vld [vmem:[#allocation7 + $0x1c0] sm:$0xff]
    %v126 = vld [vmem:[#allocation7 + $0x1c8] sm:$0xff]
    %v127 = vld [vmem:[#allocation7 + $0x1d0] sm:$0xff]
    %v128 = vld [vmem:[#allocation7 + $0x1d8] sm:$0xff]
    %v129 = vld [vmem:[#allocation7 + $0x1e0] sm:$0xff]
    %v130 = vld [vmem:[#allocation7 + $0x1e8] sm:$0xff]
    %v131 = vld [vmem:[#allocation7 + $0x1f0] sm:$0xff]
    %v132 = vld [vmem:[#allocation7 + $0x1f8] sm:$0xff]
    %v133 = vld [vmem:[#allocation7 + $0x200] sm:$0xff]
    %v134 = vld [vmem:[#allocation7 + $0x208] sm:$0xff]
    %v135 = vld [vmem:[#allocation7 + $0x210] sm:$0xff]
    %v136 = vld [vmem:[#allocation7 + $0x218] sm:$0xff]
    %v137 = vld [vmem:[#allocation7 + $0x220] sm:$0xff]
    %v138 = vld [vmem:[#allocation7 + $0x228] sm:$0xff]
    %v139 = vld [vmem:[#allocation7 + $0x230] sm:$0xff]
    %v140 = vld [vmem:[#allocation7 + $0x238] sm:$0xff]
    %v141 = vld [vmem:[#allocation7 + $0x240] sm:$0xff]
    %v142 = vld [vmem:[#allocation7 + $0x248] sm:$0xff]
    %v143 = vld [vmem:[#allocation7 + $0x250] sm:$0xff]
    %v144 = vld [vmem:[#allocation7 + $0x258] sm:$0xff]
    %v145 = vld [vmem:[#allocation7 + $0x260] sm:$0xff]
    %v146 = vld [vmem:[#allocation7 + $0x268] sm:$0xff]
    %v147 = vld [vmem:[#allocation7 + $0x270] sm:$0xff]
    %v148 = vld [vmem:[#allocation7 + $0x278] sm:$0xff]
    %v149 = vld [vmem:[#allocation7 + $0x280] sm:$0xff]
    %v150 = vld [vmem:[#allocation7 + $0x288] sm:$0xff]
    %v151 = vld [vmem:[#allocation7 + $0x290] sm:$0xff]
    %v152 = vld [vmem:[#allocation7 + $0x298] sm:$0xff]
    %v153 = vld [vmem:[#allocation7 + $0x2a0] sm:$0xff]
    %v154 = vld [vmem:[#allocation7 + $0x2a8] sm:$0xff]
    %v155 = vld [vmem:[#allocation7 + $0x2b0] sm:$0xff]
    %v156 = vld [vmem:[#allocation7 + $0x2b8] sm:$0xff]
    %v157 = vld [vmem:[#allocation7 + $0x2c0] sm:$0xff]
    %v158 = vld [vmem:[#allocation7 + $0x2c8] sm:$0xff]
    %v159 = vld [vmem:[#allocation7 + $0x2d0] sm:$0xff]
    %v160 = vld [vmem:[#allocation7 + $0x2d8] sm:$0xff]
    %v161 = vld [vmem:[#allocation7 + $0x2e0] sm:$0xff]
    %v162 = vld [vmem:[#allocation7 + $0x2e8] sm:$0xff]
    %v163 = vld [vmem:[#allocation7 + $0x2f0] sm:$0xff]
    %v164 = vld [vmem:[#allocation7 + $0x2f8] sm:$0xff]
    %v165 = vld [vmem:[#allocation7 + $0x300] sm:$0xff]
    %v166 = vld [vmem:[#allocation7 + $0x308] sm:$0xff]
    %v167 = vld [vmem:[#allocation7 + $0x310] sm:$0xff]
    %v168 = vld [vmem:[#allocation7 + $0x318] sm:$0xff]
    %v169 = vld [vmem:[#allocation7 + $0x320] sm:$0xff]
    %v170 = vld [vmem:[#allocation7 + $0x328] sm:$0xff]
    %v171 = vld [vmem:[#allocation7 + $0x330] sm:$0xff]
    %v172 = vld [vmem:[#allocation7 + $0x338] sm:$0xff]
    %v173 = vld [vmem:[#allocation7 + $0x340] sm:$0xff]
    %v174 = vld [vmem:[#allocation7 + $0x348] sm:$0xff]
    %v175 = vld [vmem:[#allocation7 + $0x350] sm:$0xff]
    %v176 = vld [vmem:[#allocation7 + $0x358] sm:$0xff]
    %v177 = vld [vmem:[#allocation7 + $0x360] sm:$0xff]
    %v178 = vld [vmem:[#allocation7 + $0x368] sm:$0xff]
    %v179 = vld [vmem:[#allocation7 + $0x370] sm:$0xff]
    %v180 = vld [vmem:[#allocation7 + $0x378] sm:$0xff]
    %v181 = vld [vmem:[#allocation7 + $0x380] sm:$0xff]
    %v182 = vld [vmem:[#allocation7 + $0x388] sm:$0xff]
    %v183 = vld [vmem:[#allocation7 + $0x390] sm:$0xff]
    %v184 = vld [vmem:[#allocation7 + $0x398] sm:$0xff]
    %v185 = vld [vmem:[#allocation7 + $0x3a0] sm:$0xff]
    %v186 = vld [vmem:[#allocation7 + $0x3a8] sm:$0xff]
    %v187 = vld [vmem:[#allocation7 + $0x3b0] sm:$0xff]
    %v188 = vld [vmem:[#allocation7 + $0x3b8] sm:$0xff]
    %v189 = vld [vmem:[#allocation7 + $0x3c0] sm:$0xff]
    %v190 = vld [vmem:[#allocation7 + $0x3c8] sm:$0xff]
    %v191 = vld [vmem:[#allocation7 + $0x3d0] sm:$0xff]
    %v192 = vld [vmem:[#allocation7 + $0x3d8] sm:$0xff]
    %v193 = vld [vmem:[#allocation7 + $0x3e0] sm:$0xff]
    %v194 = vld [vmem:[#allocation7 + $0x3e8] sm:$0xff]
    %v195 = vld [vmem:[#allocation7 + $0x3f0] sm:$0xff]
    %v196 = vld [vmem:[#allocation7 + $0x3f8] sm:$0xff]
    %v197 = vld [vmem:[#allocation7 + $0x400] sm:$0xff]
    %v198 = vld [vmem:[#allocation7 + $0x408] sm:$0xff]
    %v199 = vld [vmem:[#allocation7 + $0x410] sm:$0xff]
    %v200 = vld [vmem:[#allocation7 + $0x418] sm:$0xff]
    %v201 = vld [vmem:[#allocation7 + $0x420] sm:$0xff]
    %v202 = vld [vmem:[#allocation7 + $0x428] sm:$0xff]
    %v203 = vld [vmem:[#allocation7 + $0x430] sm:$0xff]
    %v204 = vld [vmem:[#allocation7 + $0x438] sm:$0xff]
    %v205 = vld [vmem:[#allocation7 + $0x440] sm:$0xff]
    %v206 = vld [vmem:[#allocation7 + $0x448] sm:$0xff]
    %v207 = vld [vmem:[#allocation7 + $0x450] sm:$0xff]
    %v208 = vld [vmem:[#allocation7 + $0x458] sm:$0xff]
    %v209 = vld [vmem:[#allocation7 + $0x460] sm:$0xff]
    %v210 = vld [vmem:[#allocation7 + $0x468] sm:$0xff]
    %v211 = vld [vmem:[#allocation7 + $0x470] sm:$0xff]
    %v212 = vld [vmem:[#allocation7 + $0x478] sm:$0xff]
    %v213 = vld [vmem:[#allocation7 + $0x480] sm:$0xff]
    %v214 = vld [vmem:[#allocation7 + $0x488] sm:$0xff]
    %v215 = vld [vmem:[#allocation7 + $0x490] sm:$0xff]
    %v216 = vld [vmem:[#allocation7 + $0x498] sm:$0xff]
    %v217 = vld [vmem:[#allocation7 + $0x4a0] sm:$0xff]
    %v218 = vld [vmem:[#allocation7 + $0x4a8] sm:$0xff]
    %v219 = vld [vmem:[#allocation7 + $0x4b0] sm:$0xff]
    %v220 = vld [vmem:[#allocation7 + $0x4b8] sm:$0xff]
    %v221 = vld [vmem:[#allocation7 + $0x4c0] sm:$0xff]
    %v222 = vld [vmem:[#allocation7 + $0x4c8] sm:$0xff]
    %v223 = vld [vmem:[#allocation7 + $0x4d0] sm:$0xff]
    %v224 = vld [vmem:[#allocation7 + $0x4d8] sm:$0xff]
    %v225 = vld [vmem:[#allocation7 + $0x4e0] sm:$0xff]
    %v226 = vld [vmem:[#allocation7 + $0x4e8] sm:$0xff]
    %v227 = vld [vmem:[#allocation7 + $0x4f0] sm:$0xff]
    %v228 = vld [vmem:[#allocation7 + $0x4f8] sm:$0xff]
    %v229 = vld [vmem:[#allocation7 + $0x500] sm:$0xff]
    %v230 = vld [vmem:[#allocation7 + $0x508] sm:$0xff]
    %v231 = vld [vmem:[#allocation7 + $0x510] sm:$0xff]
    %v232 = vld [vmem:[#allocation7 + $0x518] sm:$0xff]
    %v233 = vld [vmem:[#allocation7 + $0x520] sm:$0xff]
    %v234 = vld [vmem:[#allocation7 + $0x528] sm:$0xff]
    %v235 = vld [vmem:[#allocation7 + $0x530] sm:$0xff]
    %v236 = vld [vmem:[#allocation7 + $0x538] sm:$0xff]
    %v237 = vld [vmem:[#allocation7 + $0x540] sm:$0xff]
    %v238 = vld [vmem:[#allocation7 + $0x548] sm:$0xff]
    %v239 = vld [vmem:[#allocation7 + $0x550] sm:$0xff]
    %v240 = vld [vmem:[#allocation7 + $0x558] sm:$0xff]
    %v241 = vld [vmem:[#allocation7 + $0x560] sm:$0xff]
    %v242 = vld [vmem:[#allocation7 + $0x568] sm:$0xff]
    %v243 = vld [vmem:[#allocation7 + $0x570] sm:$0xff]
    %v244 = vld [vmem:[#allocation7 + $0x578] sm:$0xff]
    %v245 = vld [vmem:[#allocation7 + $0x580] sm:$0xff]
    %v246 = vld [vmem:[#allocation7 + $0x588] sm:$0xff]
    %v247 = vld [vmem:[#allocation7 + $0x590] sm:$0xff]
    %v248 = vld [vmem:[#allocation7 + $0x598] sm:$0xff]
    %v249 = vld [vmem:[#allocation7 + $0x5a0] sm:$0xff]
    %v250 = vld [vmem:[#allocation7 + $0x5a8] sm:$0xff]
    %v251 = vld [vmem:[#allocation7 + $0x5b0] sm:$0xff]
    %v252 = vld [vmem:[#allocation7 + $0x5b8] sm:$0xff]
    %v253 = vld [vmem:[#allocation7 + $0x5c0] sm:$0xff]
    %v254 = vld [vmem:[#allocation7 + $0x5c8] sm:$0xff]
    %v255 = vld [vmem:[#allocation7 + $0x5d0] sm:$0xff]
    %v256 = vld [vmem:[#allocation7 + $0x5d8] sm:$0xff]
    %v257 = vld [vmem:[#allocation7 + $0x5e0] sm:$0xff]
    %v258 = vld [vmem:[#allocation7 + $0x5e8] sm:$0xff]
    %v259 = vld [vmem:[#allocation7 + $0x5f0] sm:$0xff]
    %v260 = vld [vmem:[#allocation7 + $0x5f8] sm:$0xff]
    %v261 = vld [vmem:[#allocation7 + $0x600] sm:$0xff]
    %v262 = vld [vmem:[#allocation7 + $0x608] sm:$0xff]
    %v263 = vld [vmem:[#allocation7 + $0x610] sm:$0xff]
    %v264 = vld [vmem:[#allocation7 + $0x618] sm:$0xff]
    %v265 = vld [vmem:[#allocation7 + $0x620] sm:$0xff]
    %v266 = vld [vmem:[#allocation7 + $0x628] sm:$0xff]
    %v267 = vld [vmem:[#allocation7 + $0x630] sm:$0xff]
    %v268 = vld [vmem:[#allocation7 + $0x638] sm:$0xff]
    %v269 = vld [vmem:[#allocation7 + $0x640] sm:$0xff]
    %v270 = vld [vmem:[#allocation7 + $0x648] sm:$0xff]
    %v271 = vld [vmem:[#allocation7 + $0x650] sm:$0xff]
    %v272 = vld [vmem:[#allocation7 + $0x658] sm:$0xff]
    %v273 = vld [vmem:[#allocation7 + $0x660] sm:$0xff]
    %v274 = vld [vmem:[#allocation7 + $0x668] sm:$0xff]
    %v275 = vld [vmem:[#allocation7 + $0x670] sm:$0xff]
    %v276 = vld [vmem:[#allocation7 + $0x678] sm:$0xff]
    %v277 = vld [vmem:[#allocation7 + $0x680] sm:$0xff]
    %v278 = vld [vmem:[#allocation7 + $0x688] sm:$0xff]
    %v279 = vld [vmem:[#allocation7 + $0x690] sm:$0xff]
    %v280 = vld [vmem:[#allocation7 + $0x698] sm:$0xff]
    %v281 = vld [vmem:[#allocation7 + $0x6a0] sm:$0xff]
    %v282 = vld [vmem:[#allocation7 + $0x6a8] sm:$0xff]
    %v283 = vld [vmem:[#allocation7 + $0x6b0] sm:$0xff]
    %v284 = vld [vmem:[#allocation7 + $0x6b8] sm:$0xff]
    %v285 = vld [vmem:[#allocation7 + $0x6c0] sm:$0xff]
    %v286 = vld [vmem:[#allocation7 + $0x6c8] sm:$0xff]
    %v287 = vld [vmem:[#allocation7 + $0x6d0] sm:$0xff]
    %v288 = vld [vmem:[#allocation7 + $0x6d8] sm:$0xff]
    %v289 = vld [vmem:[#allocation7 + $0x6e0] sm:$0xff]
    %v290 = vld [vmem:[#allocation7 + $0x6e8] sm:$0xff]
    %v291 = vld [vmem:[#allocation7 + $0x6f0] sm:$0xff]
    %v292 = vld [vmem:[#allocation7 + $0x6f8] sm:$0xff]
    %v301 = vunpack.c.l.b16 %v51
    %v302 = vunpack.c.h.b16 %v51
    %v303 = vunpack.c.l.b16 %v52
    %v304 = vunpack.c.h.b16 %v52
    %v305 = vunpack.c.l.b16 %v53
    %v306 = vunpack.c.h.b16 %v53
    %v307 = vunpack.c.l.b16 %v54
    %v308 = vunpack.c.l.b16 %v55
    %v309 = vunpack.c.h.b16 %v55
    %v310 = vunpack.c.l.b16 %v56
    %v311 = vunpack.c.h.b16 %v56
    %v312 = vunpack.c.l.b16 %v57
    %v313 = vunpack.c.h.b16 %v57
    %v314 = vunpack.c.l.b16 %v58
    %v315 = vpack.c.b16 %v308, %v301
    %v316 = vpack.c.b16 %v309, %v302
    %v317 = vpack.c.b16 %v310, %v303
    %v318 = vpack.c.b16 %v311, %v304
    %v319 = vpack.c.b16 %v312, %v305
    %v320 = vpack.c.b16 %v313, %v306
    %v321 = vpack.c.b16 %v314, %v307
    %v553 = vunpack.c.l.b16 %v69
    %v554 = vunpack.c.h.b16 %v69
    %v555 = vunpack.c.l.b16 %v70
    %v556 = vunpack.c.h.b16 %v70
    %v557 = vunpack.c.l.b16 %v71
    %v558 = vunpack.c.h.b16 %v71
    %v559 = vunpack.c.l.b16 %v72
    %v560 = vunpack.c.h.b16 %v72
    %v561 = vunpack.c.l.b16 %v73
    %v562 = vunpack.c.h.b16 %v73
    %v563 = vunpack.c.l.b16 %v74
    %v564 = vunpack.c.h.b16 %v74
    %v565 = vunpack.c.l.b16 %v75
    %v566 = vunpack.c.h.b16 %v75
    %v567 = vunpack.c.l.b16 %v76
    %v568 = vunpack.c.h.b16 %v76
    %v569 = vunpack.c.l.b16 %v77
    %v570 = vunpack.c.h.b16 %v77
    %v571 = vunpack.c.l.b16 %v78
    %v572 = vunpack.c.h.b16 %v78
    %v573 = vunpack.c.l.b16 %v79
    %v574 = vunpack.c.h.b16 %v79
    %v575 = vunpack.c.l.b16 %v80
    %v576 = vunpack.c.h.b16 %v80
    %v577 = vunpack.c.l.b16 %v81
    %v578 = vunpack.c.h.b16 %v81
    %v579 = vunpack.c.l.b16 %v82
    %v580 = vunpack.c.h.b16 %v82
    %v581 = vunpack.c.l.b16 %v83
    %v582 = vunpack.c.h.b16 %v83
    %v583 = vunpack.c.l.b16 %v84
    %v584 = vunpack.c.h.b16 %v84
    %v585 = vunpack.c.l.b16 %v85
    %v586 = vunpack.c.h.b16 %v85
    %v587 = vunpack.c.l.b16 %v86
    %v588 = vunpack.c.h.b16 %v86
    %v589 = vunpack.c.l.b16 %v87
    %v590 = vunpack.c.h.b16 %v87
    %v591 = vunpack.c.l.b16 %v88
    %v592 = vunpack.c.h.b16 %v88
    %v593 = vunpack.c.l.b16 %v89
    %v594 = vunpack.c.h.b16 %v89
    %v595 = vunpack.c.l.b16 %v90
    %v596 = vunpack.c.h.b16 %v90
    %v597 = vunpack.c.l.b16 %v91
    %v598 = vunpack.c.h.b16 %v91
    %v599 = vunpack.c.l.b16 %v92
    %v600 = vunpack.c.h.b16 %v92
    %v601 = vunpack.c.l.b16 %v93
    %v602 = vunpack.c.h.b16 %v93
    %v603 = vunpack.c.l.b16 %v94
    %v604 = vunpack.c.h.b16 %v94
    %v605 = vunpack.c.l.b16 %v95
    %v606 = vunpack.c.h.b16 %v95
    %v607 = vunpack.c.l.b16 %v96
    %v608 = vunpack.c.h.b16 %v96
    %v609 = vunpack.c.l.b16 %v97
    %v610 = vunpack.c.h.b16 %v97
    %v611 = vunpack.c.l.b16 %v98
    %v612 = vunpack.c.h.b16 %v98
    %v613 = vunpack.c.l.b16 %v99
    %v614 = vunpack.c.h.b16 %v99
    %v615 = vunpack.c.l.b16 %v100
    %v616 = vunpack.c.h.b16 %v100
    %v617 = vunpack.c.l.b16 %v101
    %v618 = vunpack.c.h.b16 %v101
    %v619 = vunpack.c.l.b16 %v102
    %v620 = vunpack.c.h.b16 %v102
    %v621 = vunpack.c.l.b16 %v103
    %v622 = vunpack.c.h.b16 %v103
    %v623 = vunpack.c.l.b16 %v104
    %v624 = vunpack.c.h.b16 %v104
    %v625 = vunpack.c.l.b16 %v105
    %v626 = vunpack.c.h.b16 %v105
    %v627 = vunpack.c.l.b16 %v106
    %v628 = vunpack.c.h.b16 %v106
    %v629 = vunpack.c.l.b16 %v107
    %v630 = vunpack.c.h.b16 %v107
    %v631 = vunpack.c.l.b16 %v108
    %v632 = vunpack.c.h.b16 %v108
    %v633 = vunpack.c.l.b16 %v109
    %v634 = vunpack.c.h.b16 %v109
    %v635 = vunpack.c.l.b16 %v110
    %v636 = vunpack.c.h.b16 %v110
    %v637 = vunpack.c.l.b16 %v111
    %v638 = vunpack.c.h.b16 %v111
    %v639 = vunpack.c.l.b16 %v112
    %v640 = vunpack.c.h.b16 %v112
    %v641 = vunpack.c.l.b16 %v113
    %v642 = vunpack.c.h.b16 %v113
    %v643 = vunpack.c.l.b16 %v114
    %v644 = vunpack.c.h.b16 %v114
    %v645 = vunpack.c.l.b16 %v115
    %v646 = vunpack.c.h.b16 %v115
    %v647 = vunpack.c.l.b16 %v116
    %v648 = vunpack.c.h.b16 %v116
    %v649 = vunpack.c.l.b16 %v117
    %v650 = vunpack.c.h.b16 %v117
    %v651 = vunpack.c.l.b16 %v118
    %v652 = vunpack.c.h.b16 %v118
    %v653 = vunpack.c.l.b16 %v119
    %v654 = vunpack.c.h.b16 %v119
    %v655 = vunpack.c.l.b16 %v120
    %v656 = vunpack.c.h.b16 %v120
    %v657 = vunpack.c.l.b16 %v121
    %v658 = vunpack.c.h.b16 %v121
    %v659 = vunpack.c.l.b16 %v122
    %v660 = vunpack.c.h.b16 %v122
    %v661 = vunpack.c.l.b16 %v123
    %v662 = vunpack.c.h.b16 %v123
    %v663 = vunpack.c.l.b16 %v124
    %v664 = vunpack.c.h.b16 %v124
    %v665 = vunpack.c.l.b16 %v125
    %v666 = vunpack.c.h.b16 %v125
    %v667 = vunpack.c.l.b16 %v126
    %v668 = vunpack.c.h.b16 %v126
    %v669 = vunpack.c.l.b16 %v127
    %v670 = vunpack.c.h.b16 %v127
    %v671 = vunpack.c.l.b16 %v128
    %v672 = vunpack.c.h.b16 %v128
    %v673 = vunpack.c.l.b16 %v129
    %v674 = vunpack.c.h.b16 %v129
    %v675 = vunpack.c.l.b16 %v130
    %v676 = vunpack.c.h.b16 %v130
    %v677 = vunpack.c.l.b16 %v131
    %v678 = vunpack.c.h.b16 %v131
    %v679 = vunpack.c.l.b16 %v132
    %v680 = vunpack.c.h.b16 %v132
    %v681 = vunpack.c.l.b16 %v133
    %v682 = vunpack.c.h.b16 %v133
    %v683 = vunpack.c.l.b16 %v134
    %v684 = vunpack.c.h.b16 %v134
    %v685 = vunpack.c.l.b16 %v135
    %v686 = vunpack.c.h.b16 %v135
    %v687 = vunpack.c.l.b16 %v136
    %v688 = vunpack.c.h.b16 %v136
    %v689 = vunpack.c.l.b16 %v137
    %v690 = vunpack.c.h.b16 %v137
    %v691 = vunpack.c.l.b16 %v138
    %v692 = vunpack.c.h.b16 %v138
    %v693 = vunpack.c.l.b16 %v139
    %v694 = vunpack.c.h.b16 %v139
    %v695 = vunpack.c.l.b16 %v140
    %v696 = vunpack.c.h.b16 %v140
    %v697 = vunpack.c.l.b16 %v141
    %v698 = vunpack.c.h.b16 %v141
    %v699 = vunpack.c.l.b16 %v142
    %v700 = vunpack.c.h.b16 %v142
    %v701 = vunpack.c.l.b16 %v143
    %v702 = vunpack.c.h.b16 %v143
    %v703 = vunpack.c.l.b16 %v144
    %v704 = vunpack.c.h.b16 %v144
    %v705 = vunpack.c.l.b16 %v145
    %v706 = vunpack.c.h.b16 %v145
    %v707 = vunpack.c.l.b16 %v146
    %v708 = vunpack.c.h.b16 %v146
    %v709 = vunpack.c.l.b16 %v147
    %v710 = vunpack.c.h.b16 %v147
    %v711 = vunpack.c.l.b16 %v148
    %v712 = vunpack.c.h.b16 %v148
    %v713 = vunpack.c.l.b16 %v149
    %v714 = vunpack.c.h.b16 %v149
    %v715 = vunpack.c.l.b16 %v150
    %v716 = vunpack.c.h.b16 %v150
    %v717 = vunpack.c.l.b16 %v151
    %v718 = vunpack.c.h.b16 %v151
    %v719 = vunpack.c.l.b16 %v152
    %v720 = vunpack.c.h.b16 %v152
    %v721 = vunpack.c.l.b16 %v153
    %v722 = vunpack.c.h.b16 %v153
    %v723 = vunpack.c.l.b16 %v154
    %v724 = vunpack.c.h.b16 %v154
    %v725 = vunpack.c.l.b16 %v155
    %v726 = vunpack.c.h.b16 %v155
    %v727 = vunpack.c.l.b16 %v156
    %v728 = vunpack.c.h.b16 %v156
    %v729 = vunpack.c.l.b16 %v157
    %v730 = vunpack.c.h.b16 %v157
    %v731 = vunpack.c.l.b16 %v158
    %v732 = vunpack.c.h.b16 %v158
    %v733 = vunpack.c.l.b16 %v159
    %v734 = vunpack.c.h.b16 %v159
    %v735 = vunpack.c.l.b16 %v160
    %v736 = vunpack.c.h.b16 %v160
    %v737 = vunpack.c.l.b16 %v161
    %v738 = vunpack.c.h.b16 %v161
    %v739 = vunpack.c.l.b16 %v162
    %v740 = vunpack.c.h.b16 %v162
    %v741 = vunpack.c.l.b16 %v163
    %v742 = vunpack.c.h.b16 %v163
    %v743 = vunpack.c.l.b16 %v164
    %v744 = vunpack.c.h.b16 %v164
    %v745 = vunpack.c.l.b16 %v165
    %v746 = vunpack.c.h.b16 %v165
    %v747 = vunpack.c.l.b16 %v166
    %v748 = vunpack.c.h.b16 %v166
    %v749 = vunpack.c.l.b16 %v167
    %v750 = vunpack.c.h.b16 %v167
    %v751 = vunpack.c.l.b16 %v168
    %v752 = vunpack.c.h.b16 %v168
    %v753 = vunpack.c.l.b16 %v169
    %v754 = vunpack.c.h.b16 %v169
    %v755 = vunpack.c.l.b16 %v170
    %v756 = vunpack.c.h.b16 %v170
    %v757 = vunpack.c.l.b16 %v171
    %v758 = vunpack.c.h.b16 %v171
    %v759 = vunpack.c.l.b16 %v172
    %v760 = vunpack.c.h.b16 %v172
    %v761 = vunpack.c.l.b16 %v173
    %v762 = vunpack.c.h.b16 %v173
    %v763 = vunpack.c.l.b16 %v174
    %v764 = vunpack.c.h.b16 %v174
    %v765 = vunpack.c.l.b16 %v175
    %v766 = vunpack.c.h.b16 %v175
    %v767 = vunpack.c.l.b16 %v176
    %v768 = vunpack.c.h.b16 %v176
    %v769 = vunpack.c.l.b16 %v177
    %v770 = vunpack.c.h.b16 %v177
    %v771 = vunpack.c.l.b16 %v178
    %v772 = vunpack.c.h.b16 %v178
    %v773 = vunpack.c.l.b16 %v179
    %v774 = vunpack.c.h.b16 %v179
    %v775 = vunpack.c.l.b16 %v180
    %v776 = vunpack.c.h.b16 %v180
    %v777 = vunpack.c.l.b16 %v181
    %v778 = vunpack.c.h.b16 %v181
    %v779 = vunpack.c.l.b16 %v182
    %v780 = vunpack.c.h.b16 %v182
    %v781 = vunpack.c.l.b16 %v183
    %v782 = vunpack.c.h.b16 %v183
    %v783 = vunpack.c.l.b16 %v184
    %v784 = vunpack.c.h.b16 %v184
    %v785 = vunpack.c.l.b16 %v185
    %v786 = vunpack.c.h.b16 %v185
    %v787 = vunpack.c.l.b16 %v186
    %v788 = vunpack.c.h.b16 %v186
    %v789 = vunpack.c.l.b16 %v187
    %v790 = vunpack.c.h.b16 %v187
    %v791 = vunpack.c.l.b16 %v188
    %v792 = vunpack.c.h.b16 %v188
    %v793 = vunpack.c.l.b16 %v189
    %v794 = vunpack.c.h.b16 %v189
    %v795 = vunpack.c.l.b16 %v190
    %v796 = vunpack.c.h.b16 %v190
    %v797 = vunpack.c.l.b16 %v191
    %v798 = vunpack.c.h.b16 %v191
    %v799 = vunpack.c.l.b16 %v192
    %v800 = vunpack.c.h.b16 %v192
    %v801 = vunpack.c.l.b16 %v193
    %v802 = vunpack.c.h.b16 %v193
    %v803 = vunpack.c.l.b16 %v194
    %v804 = vunpack.c.h.b16 %v194
    %v805 = vunpack.c.l.b16 %v195
    %v806 = vunpack.c.h.b16 %v195
    %v807 = vunpack.c.l.b16 %v196
    %v808 = vunpack.c.h.b16 %v196
    %v809 = vunpack.c.l.b16 %v197
    %v810 = vunpack.c.h.b16 %v197
    %v811 = vunpack.c.l.b16 %v198
    %v812 = vunpack.c.h.b16 %v198
    %v813 = vunpack.c.l.b16 %v199
    %v814 = vunpack.c.h.b16 %v199
    %v815 = vunpack.c.l.b16 %v200
    %v816 = vunpack.c.h.b16 %v200
    %v817 = vunpack.c.l.b16 %v201
    %v818 = vunpack.c.h.b16 %v201
    %v819 = vunpack.c.l.b16 %v202
    %v820 = vunpack.c.h.b16 %v202
    %v821 = vunpack.c.l.b16 %v203
    %v822 = vunpack.c.h.b16 %v203
    %v823 = vunpack.c.l.b16 %v204
    %v824 = vunpack.c.h.b16 %v204
    %v825 = vunpack.c.l.b16 %v205
    %v826 = vunpack.c.h.b16 %v205
    %v827 = vunpack.c.l.b16 %v206
    %v828 = vunpack.c.h.b16 %v206
    %v829 = vunpack.c.l.b16 %v207
    %v830 = vunpack.c.h.b16 %v207
    %v831 = vunpack.c.l.b16 %v208
    %v832 = vunpack.c.h.b16 %v208
    %v833 = vunpack.c.l.b16 %v209
    %v834 = vunpack.c.h.b16 %v209
    %v835 = vunpack.c.l.b16 %v210
    %v836 = vunpack.c.h.b16 %v210
    %v837 = vunpack.c.l.b16 %v211
    %v838 = vunpack.c.h.b16 %v211
    %v839 = vunpack.c.l.b16 %v212
    %v840 = vunpack.c.h.b16 %v212
    %v841 = vunpack.c.l.b16 %v213
    %v842 = vunpack.c.h.b16 %v213
    %v843 = vunpack.c.l.b16 %v214
    %v844 = vunpack.c.h.b16 %v214
    %v845 = vunpack.c.l.b16 %v215
    %v846 = vunpack.c.h.b16 %v215
    %v847 = vunpack.c.l.b16 %v216
    %v848 = vunpack.c.h.b16 %v216
    %v849 = vunpack.c.l.b16 %v217
    %v850 = vunpack.c.h.b16 %v217
    %v851 = vunpack.c.l.b16 %v218
    %v852 = vunpack.c.h.b16 %v218
    %v853 = vunpack.c.l.b16 %v219
    %v854 = vunpack.c.h.b16 %v219
    %v855 = vunpack.c.l.b16 %v220
    %v856 = vunpack.c.h.b16 %v220
    %v857 = vunpack.c.l.b16 %v221
    %v858 = vunpack.c.h.b16 %v221
    %v859 = vunpack.c.l.b16 %v222
    %v860 = vunpack.c.h.b16 %v222
    %v861 = vunpack.c.l.b16 %v223
    %v862 = vunpack.c.h.b16 %v223
    %v863 = vunpack.c.l.b16 %v224
    %v864 = vunpack.c.h.b16 %v224
    %v865 = vunpack.c.l.b16 %v225
    %v866 = vunpack.c.h.b16 %v225
    %v867 = vunpack.c.l.b16 %v226
    %v868 = vunpack.c.h.b16 %v226
    %v869 = vunpack.c.l.b16 %v227
    %v870 = vunpack.c.h.b16 %v227
    %v871 = vunpack.c.l.b16 %v228
    %v872 = vunpack.c.h.b16 %v228
    %v873 = vunpack.c.l.b16 %v229
    %v874 = vunpack.c.h.b16 %v229
    %v875 = vunpack.c.l.b16 %v230
    %v876 = vunpack.c.h.b16 %v230
    %v877 = vunpack.c.l.b16 %v231
    %v878 = vunpack.c.h.b16 %v231
    %v879 = vunpack.c.l.b16 %v232
    %v880 = vunpack.c.h.b16 %v232
    %v881 = vunpack.c.l.b16 %v233
    %v882 = vunpack.c.h.b16 %v233
    %v883 = vunpack.c.l.b16 %v234
    %v884 = vunpack.c.h.b16 %v234
    %v885 = vunpack.c.l.b16 %v235
    %v886 = vunpack.c.h.b16 %v235
    %v887 = vunpack.c.l.b16 %v236
    %v888 = vunpack.c.h.b16 %v236
    %v889 = vunpack.c.l.b16 %v237
    %v890 = vunpack.c.h.b16 %v237
    %v891 = vunpack.c.l.b16 %v238
    %v892 = vunpack.c.h.b16 %v238
    %v893 = vunpack.c.l.b16 %v239
    %v894 = vunpack.c.h.b16 %v239
    %v895 = vunpack.c.l.b16 %v240
    %v896 = vunpack.c.h.b16 %v240
    %v897 = vunpack.c.l.b16 %v241
    %v898 = vunpack.c.h.b16 %v241
    %v899 = vunpack.c.l.b16 %v242
    %v900 = vunpack.c.h.b16 %v242
    %v901 = vunpack.c.l.b16 %v243
    %v902 = vunpack.c.h.b16 %v243
    %v903 = vunpack.c.l.b16 %v244
    %v904 = vunpack.c.h.b16 %v244
    %v905 = vunpack.c.l.b16 %v245
    %v906 = vunpack.c.h.b16 %v245
    %v907 = vunpack.c.l.b16 %v246
    %v908 = vunpack.c.h.b16 %v246
    %v909 = vunpack.c.l.b16 %v247
    %v910 = vunpack.c.h.b16 %v247
    %v911 = vunpack.c.l.b16 %v248
    %v912 = vunpack.c.h.b16 %v248
    %v913 = vunpack.c.l.b16 %v249
    %v914 = vunpack.c.h.b16 %v249
    %v915 = vunpack.c.l.b16 %v250
    %v916 = vunpack.c.h.b16 %v250
    %v917 = vunpack.c.l.b16 %v251
    %v918 = vunpack.c.h.b16 %v251
    %v919 = vunpack.c.l.b16 %v252
    %v920 = vunpack.c.h.b16 %v252
    %v921 = vunpack.c.l.b16 %v253
    %v922 = vunpack.c.h.b16 %v253
    %v923 = vunpack.c.l.b16 %v254
    %v924 = vunpack.c.h.b16 %v254
    %v925 = vunpack.c.l.b16 %v255
    %v926 = vunpack.c.h.b16 %v255
    %v927 = vunpack.c.l.b16 %v256
    %v928 = vunpack.c.h.b16 %v256
    %v929 = vunpack.c.l.b16 %v257
    %v930 = vunpack.c.h.b16 %v257
    %v931 = vunpack.c.l.b16 %v258
    %v932 = vunpack.c.h.b16 %v258
    %v933 = vunpack.c.l.b16 %v259
    %v934 = vunpack.c.h.b16 %v259
    %v935 = vunpack.c.l.b16 %v260
    %v936 = vunpack.c.h.b16 %v260
    %v937 = vunpack.c.l.b16 %v261
    %v938 = vunpack.c.h.b16 %v261
    %v939 = vunpack.c.l.b16 %v262
    %v940 = vunpack.c.h.b16 %v262
    %v941 = vunpack.c.l.b16 %v263
    %v942 = vunpack.c.h.b16 %v263
    %v943 = vunpack.c.l.b16 %v264
    %v944 = vunpack.c.h.b16 %v264
    %v945 = vunpack.c.l.b16 %v265
    %v946 = vunpack.c.h.b16 %v265
    %v947 = vunpack.c.l.b16 %v266
    %v948 = vunpack.c.h.b16 %v266
    %v949 = vunpack.c.l.b16 %v267
    %v950 = vunpack.c.h.b16 %v267
    %v951 = vunpack.c.l.b16 %v268
    %v952 = vunpack.c.h.b16 %v268
    %v953 = vunpack.c.l.b16 %v269
    %v954 = vunpack.c.h.b16 %v269
    %v955 = vunpack.c.l.b16 %v270
    %v956 = vunpack.c.h.b16 %v270
    %v957 = vunpack.c.l.b16 %v271
    %v958 = vunpack.c.h.b16 %v271
    %v959 = vunpack.c.l.b16 %v272
    %v960 = vunpack.c.h.b16 %v272
    %v961 = vunpack.c.l.b16 %v273
    %v962 = vunpack.c.h.b16 %v273
    %v963 = vunpack.c.l.b16 %v274
    %v964 = vunpack.c.h.b16 %v274
    %v965 = vunpack.c.l.b16 %v275
    %v966 = vunpack.c.h.b16 %v275
    %v967 = vunpack.c.l.b16 %v276
    %v968 = vunpack.c.h.b16 %v276
    %v969 = vunpack.c.l.b16 %v277
    %v970 = vunpack.c.h.b16 %v277
    %v971 = vunpack.c.l.b16 %v278
    %v972 = vunpack.c.h.b16 %v278
    %v973 = vunpack.c.l.b16 %v279
    %v974 = vunpack.c.h.b16 %v279
    %v975 = vunpack.c.l.b16 %v280
    %v976 = vunpack.c.h.b16 %v280
    %v977 = vunpack.c.l.b16 %v281
    %v978 = vunpack.c.h.b16 %v281
    %v979 = vunpack.c.l.b16 %v282
    %v980 = vunpack.c.h.b16 %v282
    %v981 = vunpack.c.l.b16 %v283
    %v982 = vunpack.c.h.b16 %v283
    %v983 = vunpack.c.l.b16 %v284
    %v984 = vunpack.c.h.b16 %v284
    %v985 = vunpack.c.l.b16 %v285
    %v986 = vunpack.c.h.b16 %v285
    %v987 = vunpack.c.l.b16 %v286
    %v988 = vunpack.c.h.b16 %v286
    %v989 = vunpack.c.l.b16 %v287
    %v990 = vunpack.c.h.b16 %v287
    %v991 = vunpack.c.l.b16 %v288
    %v992 = vunpack.c.h.b16 %v288
    %v993 = vunpack.c.l.b16 %v289
    %v994 = vunpack.c.h.b16 %v289
    %v995 = vunpack.c.l.b16 %v290
    %v996 = vunpack.c.h.b16 %v290
    %v997 = vunpack.c.l.b16 %v291
    %v998 = vunpack.c.h.b16 %v291
    %v999 = vunpack.c.l.b16 %v292
    %v1000 = vunpack.c.h.b16 %v292
    %v1001 = vpack.c.b16 %v557, %v553
    %v1002 = vpack.c.b16 %v558, %v554
    %v1003 = vpack.c.b16 %v559, %v555
    %v1004 = vpack.c.b16 %v560, %v556
    %v1005 = vpack.c.b16 %v565, %v561
    %v1006 = vpack.c.b16 %v566, %v562
    %v1007 = vpack.c.b16 %v567, %v563
    %v1008 = vpack.c.b16 %v568, %v564
    %v1009 = vpack.c.b16 %v573, %v569
    %v1010 = vpack.c.b16 %v574, %v570
    %v1011 = vpack.c.b16 %v575, %v571
    %v1012 = vpack.c.b16 %v576, %v572
    %v1013 = vpack.c.b16 %v581, %v577
    %v1014 = vpack.c.b16 %v582, %v578
    %v1015 = vpack.c.b16 %v583, %v579
    %v1016 = vpack.c.b16 %v584, %v580
    %v1017 = vpack.c.b16 %v589, %v585
    %v1018 = vpack.c.b16 %v590, %v586
    %v1019 = vpack.c.b16 %v591, %v587
    %v1020 = vpack.c.b16 %v592, %v588
    %v1021 = vpack.c.b16 %v597, %v593
    %v1022 = vpack.c.b16 %v598, %v594
    %v1023 = vpack.c.b16 %v599, %v595
    %v1024 = vpack.c.b16 %v600, %v596
    %v1025 = vpack.c.b16 %v605, %v601
    %v1026 = vpack.c.b16 %v606, %v602
    %v1027 = vpack.c.b16 %v607, %v603
    %v1028 = vpack.c.b16 %v608, %v604
    %v1029 = vpack.c.b16 %v613, %v609
    %v1030 = vpack.c.b16 %v614, %v610
    %v1031 = vpack.c.b16 %v615, %v611
    %v1032 = vpack.c.b16 %v616, %v612
    %v1033 = vpack.c.b16 %v621, %v617
    %v1034 = vpack.c.b16 %v622, %v618
    %v1035 = vpack.c.b16 %v623, %v619
    %v1036 = vpack.c.b16 %v624, %v620
    %v1037 = vpack.c.b16 %v629, %v625
    %v1038 = vpack.c.b16 %v630, %v626
    %v1039 = vpack.c.b16 %v631, %v627
    %v1040 = vpack.c.b16 %v632, %v628
    %v1041 = vpack.c.b16 %v637, %v633
    %v1042 = vpack.c.b16 %v638, %v634
    %v1043 = vpack.c.b16 %v639, %v635
    %v1044 = vpack.c.b16 %v640, %v636
    %v1045 = vpack.c.b16 %v645, %v641
    %v1046 = vpack.c.b16 %v646, %v642
    %v1047 = vpack.c.b16 %v647, %v643
    %v1048 = vpack.c.b16 %v648, %v644
    %v1049 = vpack.c.b16 %v653, %v649
    %v1050 = vpack.c.b16 %v654, %v650
    %v1051 = vpack.c.b16 %v655, %v651
    %v1052 = vpack.c.b16 %v656, %v652
    %v1053 = vpack.c.b16 %v661, %v657
    %v1054 = vpack.c.b16 %v662, %v658
    %v1055 = vpack.c.b16 %v663, %v659
    %v1056 = vpack.c.b16 %v664, %v660
    %v1057 = vpack.c.b16 %v669, %v665
    %v1058 = vpack.c.b16 %v670, %v666
    %v1059 = vpack.c.b16 %v671, %v667
    %v1060 = vpack.c.b16 %v672, %v668
    %v1061 = vpack.c.b16 %v677, %v673
    %v1062 = vpack.c.b16 %v678, %v674
    %v1063 = vpack.c.b16 %v679, %v675
    %v1064 = vpack.c.b16 %v680, %v676
    %v1065 = vpack.c.b16 %v685, %v681
    %v1066 = vpack.c.b16 %v686, %v682
    %v1067 = vpack.c.b16 %v687, %v683
    %v1068 = vpack.c.b16 %v688, %v684
    %v1069 = vpack.c.b16 %v693, %v689
    %v1070 = vpack.c.b16 %v694, %v690
    %v1071 = vpack.c.b16 %v695, %v691
    %v1072 = vpack.c.b16 %v696, %v692
    %v1073 = vpack.c.b16 %v701, %v697
    %v1074 = vpack.c.b16 %v702, %v698
    %v1075 = vpack.c.b16 %v703, %v699
    %v1076 = vpack.c.b16 %v704, %v700
    %v1077 = vpack.c.b16 %v709, %v705
    %v1078 = vpack.c.b16 %v710, %v706
    %v1079 = vpack.c.b16 %v711, %v707
    %v1080 = vpack.c.b16 %v712, %v708
    %v1081 = vpack.c.b16 %v717, %v713
    %v1082 = vpack.c.b16 %v718, %v714
    %v1083 = vpack.c.b16 %v719, %v715
    %v1084 = vpack.c.b16 %v720, %v716
    %v1085 = vpack.c.b16 %v725, %v721
    %v1086 = vpack.c.b16 %v726, %v722
    %v1087 = vpack.c.b16 %v727, %v723
    %v1088 = vpack.c.b16 %v728, %v724
    %v1089 = vpack.c.b16 %v733, %v729
    %v1090 = vpack.c.b16 %v734, %v730
    %v1091 = vpack.c.b16 %v735, %v731
    %v1092 = vpack.c.b16 %v736, %v732
    %v1093 = vpack.c.b16 %v741, %v737
    %v1094 = vpack.c.b16 %v742, %v738
    %v1095 = vpack.c.b16 %v743, %v739
    %v1096 = vpack.c.b16 %v744, %v740
    %v1097 = vpack.c.b16 %v749, %v745
    %v1098 = vpack.c.b16 %v750, %v746
    %v1099 = vpack.c.b16 %v751, %v747
    %v1100 = vpack.c.b16 %v752, %v748
    %v1101 = vpack.c.b16 %v757, %v753
    %v1102 = vpack.c.b16 %v758, %v754
    %v1103 = vpack.c.b16 %v759, %v755
    %v1104 = vpack.c.b16 %v760, %v756
    %v1105 = vpack.c.b16 %v765, %v761
    %v1106 = vpack.c.b16 %v766, %v762
    %v1107 = vpack.c.b16 %v767, %v763
    %v1108 = vpack.c.b16 %v768, %v764
    %v1109 = vpack.c.b16 %v773, %v769
    %v1110 = vpack.c.b16 %v774, %v770
    %v1111 = vpack.c.b16 %v775, %v771
    %v1112 = vpack.c.b16 %v776, %v772
    %v1113 = vpack.c.b16 %v781, %v777
    %v1114 = vpack.c.b16 %v782, %v778
    %v1115 = vpack.c.b16 %v783, %v779
    %v1116 = vpack.c.b16 %v784, %v780
    %v1117 = vpack.c.b16 %v789, %v785
    %v1118 = vpack.c.b16 %v790, %v786
    %v1119 = vpack.c.b16 %v791, %v787
    %v1120 = vpack.c.b16 %v792, %v788
    %v1121 = vpack.c.b16 %v797, %v793
    %v1122 = vpack.c.b16 %v798, %v794
    %v1123 = vpack.c.b16 %v799, %v795
    %v1124 = vpack.c.b16 %v800, %v796
    %v1125 = vpack.c.b16 %v805, %v801
    %v1126 = vpack.c.b16 %v806, %v802
    %v1127 = vpack.c.b16 %v807, %v803
    %v1128 = vpack.c.b16 %v808, %v804
    %v1129 = vpack.c.b16 %v813, %v809
    %v1130 = vpack.c.b16 %v814, %v810
    %v1131 = vpack.c.b16 %v815, %v811
    %v1132 = vpack.c.b16 %v816, %v812
    %v1133 = vpack.c.b16 %v821, %v817
    %v1134 = vpack.c.b16 %v822, %v818
    %v1135 = vpack.c.b16 %v823, %v819
    %v1136 = vpack.c.b16 %v824, %v820
    %v1137 = vpack.c.b16 %v829, %v825
    %v1138 = vpack.c.b16 %v830, %v826
    %v1139 = vpack.c.b16 %v831, %v827
    %v1140 = vpack.c.b16 %v832, %v828
    %v1141 = vpack.c.b16 %v837, %v833
    %v1142 = vpack.c.b16 %v838, %v834
    %v1143 = vpack.c.b16 %v839, %v835
    %v1144 = vpack.c.b16 %v840, %v836
    %v1145 = vpack.c.b16 %v845, %v841
    %v1146 = vpack.c.b16 %v846, %v842
    %v1147 = vpack.c.b16 %v847, %v843
    %v1148 = vpack.c.b16 %v848, %v844
    %v1149 = vpack.c.b16 %v853, %v849
    %v1150 = vpack.c.b16 %v854, %v850
    %v1151 = vpack.c.b16 %v855, %v851
    %v1152 = vpack.c.b16 %v856, %v852
    %v1153 = vpack.c.b16 %v861, %v857
    %v1154 = vpack.c.b16 %v862, %v858
    %v1155 = vpack.c.b16 %v863, %v859
    %v1156 = vpack.c.b16 %v864, %v860
    %v1157 = vpack.c.b16 %v869, %v865
    %v1158 = vpack.c.b16 %v870, %v866
    %v1159 = vpack.c.b16 %v871, %v867
    %v1160 = vpack.c.b16 %v872, %v868
    %v1161 = vpack.c.b16 %v877, %v873
    %v1162 = vpack.c.b16 %v878, %v874
    %v1163 = vpack.c.b16 %v879, %v875
    %v1164 = vpack.c.b16 %v880, %v876
    %v1165 = vpack.c.b16 %v885, %v881
    %v1166 = vpack.c.b16 %v886, %v882
    %v1167 = vpack.c.b16 %v887, %v883
    %v1168 = vpack.c.b16 %v888, %v884
    %v1169 = vpack.c.b16 %v893, %v889
    %v1170 = vpack.c.b16 %v894, %v890
    %v1171 = vpack.c.b16 %v895, %v891
    %v1172 = vpack.c.b16 %v896, %v892
    %v1173 = vpack.c.b16 %v901, %v897
    %v1174 = vpack.c.b16 %v902, %v898
    %v1175 = vpack.c.b16 %v903, %v899
    %v1176 = vpack.c.b16 %v904, %v900
    %v1177 = vpack.c.b16 %v909, %v905
    %v1178 = vpack.c.b16 %v910, %v906
    %v1179 = vpack.c.b16 %v911, %v907
    %v1180 = vpack.c.b16 %v912, %v908
    %v1181 = vpack.c.b16 %v917, %v913
    %v1182 = vpack.c.b16 %v918, %v914
    %v1183 = vpack.c.b16 %v919, %v915
    %v1184 = vpack.c.b16 %v920, %v916
    %v1185 = vpack.c.b16 %v925, %v921
    %v1186 = vpack.c.b16 %v926, %v922
    %v1187 = vpack.c.b16 %v927, %v923
    %v1188 = vpack.c.b16 %v928, %v924
    %v1189 = vpack.c.b16 %v933, %v929
    %v1190 = vpack.c.b16 %v934, %v930
    %v1191 = vpack.c.b16 %v935, %v931
    %v1192 = vpack.c.b16 %v936, %v932
    %v1193 = vpack.c.b16 %v941, %v937
    %v1194 = vpack.c.b16 %v942, %v938
    %v1195 = vpack.c.b16 %v943, %v939
    %v1196 = vpack.c.b16 %v944, %v940
    %v1197 = vpack.c.b16 %v949, %v945
    %v1198 = vpack.c.b16 %v950, %v946
    %v1199 = vpack.c.b16 %v951, %v947
    %v1200 = vpack.c.b16 %v952, %v948
    %v1201 = vpack.c.b16 %v957, %v953
    %v1202 = vpack.c.b16 %v958, %v954
    %v1203 = vpack.c.b16 %v959, %v955
    %v1204 = vpack.c.b16 %v960, %v956
    %v1205 = vpack.c.b16 %v965, %v961
    %v1206 = vpack.c.b16 %v966, %v962
    %v1207 = vpack.c.b16 %v967, %v963
    %v1208 = vpack.c.b16 %v968, %v964
    %v1209 = vpack.c.b16 %v973, %v969
    %v1210 = vpack.c.b16 %v974, %v970
    %v1211 = vpack.c.b16 %v975, %v971
    %v1212 = vpack.c.b16 %v976, %v972
    %v1213 = vpack.c.b16 %v981, %v977
    %v1214 = vpack.c.b16 %v982, %v978
    %v1215 = vpack.c.b16 %v983, %v979
    %v1216 = vpack.c.b16 %v984, %v980
    %v1217 = vpack.c.b16 %v989, %v985
    %v1218 = vpack.c.b16 %v990, %v986
    %v1219 = vpack.c.b16 %v991, %v987
    %v1220 = vpack.c.b16 %v992, %v988
    %v1221 = vpack.c.b16 %v997, %v993
    %v1222 = vpack.c.b16 %v998, %v994
    %v1223 = vpack.c.b16 %v999, %v995
    %v1224 = vpack.c.b16 %v1000, %v996
    %1449 = vmatprep.subr.bf16.mxu0 %v1002
    %1450 = vmatpush1.bf16.msra.mxu0 %v1001
    %1451 = vmatprep.subr.bf16.mxu0 %v1006
    %1452 = vmatpush1.bf16.msra.mxu0 %v1005
    %1453 = vmatprep.subr.bf16.mxu0 %v1010
    %1454 = vmatpush1.bf16.msra.mxu0 %v1009
    %1455 = vmatprep.subr.bf16.mxu0 %v1014
    %1456 = vmatpush1.bf16.msra.mxu0 %v1013
    %1457 = vmatprep.subr.bf16.mxu0 %v1018
    %1458 = vmatpush1.bf16.msra.mxu0 %v1017
    %1459 = vmatprep.subr.bf16.mxu0 %v1022
    %1460 = vmatpush1.bf16.msra.mxu0 %v1021
    %1461 = vmatprep.subr.bf16.mxu0 %v1026
    %1462 = vmatpush1.bf16.msra.mxu0 %v1025
    %1463 = vmatprep.subr.bf16.mxu0 %v1030
    %1464 = vmatpush1.bf16.msra.mxu0 %v1029
    %1465 = vmatprep.subr.bf16.mxu0 %v1034
    %1466 = vmatpush1.bf16.msra.mxu0 %v1033
    %1467 = vmatprep.subr.bf16.mxu0 %v1038
    %1468 = vmatpush1.bf16.msra.mxu0 %v1037
    %1469 = vmatprep.subr.bf16.mxu0 %v1042
    %1470 = vmatpush1.bf16.msra.mxu0 %v1041
    %1471 = vmatprep.subr.bf16.mxu0 %v1046
    %1472 = vmatpush1.bf16.msra.mxu0 %v1045
    %1473 = vmatprep.subr.bf16.mxu0 %v1050
    %1474 = vmatpush1.bf16.msra.mxu0 %v1049
    %1475 = vmatprep.subr.bf16.mxu0 %v1054
    %1476 = vmatpush1.bf16.msra.mxu0 %v1053
    %1477 = vmatprep.subr.bf16.mxu0 %v1058
    %1478 = vmatpush1.bf16.msra.mxu0 %v1057
    %1479 = vmatprep.subr.bf16.mxu0 %v1062
    %1480 = vmatpush1.bf16.msra.mxu0 %v1061
    %1481 = vmatprep.mubr.bf16.mxu0 %v316
    %1482 = vmatmul.mubr.bf16.gmra.mrb[0].mxu0 %v315
    %v1483 = vpop.f32.mrb[0].mxu0
    %v1484 = vadd.f32 0.0, %v1483
    %v1485 = vpop.f32.mrb[0].mxu0
    %v1486 = vadd.f32 0.0, %v1485
    %v1487 = vpop.f32.mrb[0].mxu0
    %v1488 = vadd.f32 0.0, %v1487
    %v1489 = vpop.f32.mrb[0].mxu0
    %v1490 = vadd.f32 0.0, %v1489
    %1491 = vdwg.mxu0
    %1492 = vmatprep.subr.bf16.mxu0 %v1066
    %1493 = vmatpush1.bf16.msra.mxu0 %v1065
    %1494 = vmatprep.subr.bf16.mxu0 %v1070
    %1495 = vmatpush1.bf16.msra.mxu0 %v1069
    %1496 = vmatprep.subr.bf16.mxu0 %v1074
    %1497 = vmatpush1.bf16.msra.mxu0 %v1073
    %1498 = vmatprep.subr.bf16.mxu0 %v1078
    %1499 = vmatpush1.bf16.msra.mxu0 %v1077
    %1500 = vmatprep.subr.bf16.mxu0 %v1082
    %1501 = vmatpush1.bf16.msra.mxu0 %v1081
    %1502 = vmatprep.subr.bf16.mxu0 %v1086
    %1503 = vmatpush1.bf16.msra.mxu0 %v1085
    %1504 = vmatprep.subr.bf16.mxu0 %v1090
    %1505 = vmatpush1.bf16.msra.mxu0 %v1089
    %1506 = vmatprep.subr.bf16.mxu0 %v1094
    %1507 = vmatpush1.bf16.msra.mxu0 %v1093
    %1508 = vmatprep.subr.bf16.mxu0 %v1098
    %1509 = vmatpush1.bf16.msra.mxu0 %v1097
    %1510 = vmatprep.subr.bf16.mxu0 %v1102
    %1511 = vmatpush1.bf16.msra.mxu0 %v1101
    %1512 = vmatprep.subr.bf16.mxu0 %v1106
    %1513 = vmatpush1.bf16.msra.mxu0 %v1105
    %1514 = vmatprep.subr.bf16.mxu0 %v1110
    %1515 = vmatpush1.bf16.msra.mxu0 %v1109
    %1516 = vmatprep.subr.bf16.mxu0 %v1114
    %1517 = vmatpush1.bf16.msra.mxu0 %v1113
    %1518 = vmatprep.subr.bf16.mxu0 %v1118
    %1519 = vmatpush1.bf16.msra.mxu0 %v1117
    %1520 = vmatprep.subr.bf16.mxu0 %v1122
    %1521 = vmatpush1.bf16.msra.mxu0 %v1121
    %1522 = vmatprep.subr.bf16.mxu0 %v1126
    %1523 = vmatpush1.bf16.msra.mxu0 %v1125
    %1524 = vmatprep.mubr.bf16.mxu0 %v318
    %1525 = vmatmul.mubr.bf16.gmra.mrb[0].mxu0 %v317
    %v1526 = vpop.f32.mrb[0].mxu0
    %v1527 = vadd.f32 %v1484, %v1526
    %v1528 = vpop.f32.mrb[0].mxu0
    %v1529 = vadd.f32 %v1486, %v1528
    %v1530 = vpop.f32.mrb[0].mxu0
    %v1531 = vadd.f32 %v1488, %v1530
    %v1532 = vpop.f32.mrb[0].mxu0
    %v1533 = vadd.f32 %v1490, %v1532
    %1534 = vdwg.mxu0
    %1535 = vmatprep.subr.bf16.mxu0 %v1130
    %1536 = vmatpush1.bf16.msra.mxu0 %v1129
    %1537 = vmatprep.subr.bf16.mxu0 %v1134
    %1538 = vmatpush1.bf16.msra.mxu0 %v1133
    %1539 = vmatprep.subr.bf16.mxu0 %v1138
    %1540 = vmatpush1.bf16.msra.mxu0 %v1137
    %1541 = vmatprep.subr.bf16.mxu0 %v1142
    %1542 = vmatpush1.bf16.msra.mxu0 %v1141
    %1543 = vmatprep.subr.bf16.mxu0 %v1146
    %1544 = vmatpush1.bf16.msra.mxu0 %v1145
    %1545 = vmatprep.subr.bf16.mxu0 %v1150
    %1546 = vmatpush1.bf16.msra.mxu0 %v1149
    %1547 = vmatprep.subr.bf16.mxu0 %v1154
    %1548 = vmatpush1.bf16.msra.mxu0 %v1153
    %1549 = vmatprep.subr.bf16.mxu0 %v1158
    %1550 = vmatpush1.bf16.msra.mxu0 %v1157
    %1551 = vmatprep.subr.bf16.mxu0 %v1162
    %1552 = vmatpush1.bf16.msra.mxu0 %v1161
    %1553 = vmatprep.subr.bf16.mxu0 %v1166
    %1554 = vmatpush1.bf16.msra.mxu0 %v1165
    %1555 = vmatprep.subr.bf16.mxu0 %v1170
    %1556 = vmatpush1.bf16.msra.mxu0 %v1169
    %1557 = vmatprep.subr.bf16.mxu0 %v1174
    %1558 = vmatpush1.bf16.msra.mxu0 %v1173
    %1559 = vmatprep.subr.bf16.mxu0 %v1178
    %1560 = vmatpush1.bf16.msra.mxu0 %v1177
    %1561 = vmatprep.subr.bf16.mxu0 %v1182
    %1562 = vmatpush1.bf16.msra.mxu0 %v1181
    %1563 = vmatprep.subr.bf16.mxu0 %v1186
    %1564 = vmatpush1.bf16.msra.mxu0 %v1185
    %1565 = vmatprep.subr.bf16.mxu0 %v1190
    %1566 = vmatpush1.bf16.msra.mxu0 %v1189
    %1567 = vmatprep.mubr.bf16.mxu0 %v320
    %1568 = vmatmul.mubr.bf16.gmra.mrb[0].mxu0 %v319
    %v1569 = vpop.f32.mrb[0].mxu0
    %v1570 = vadd.f32 %v1527, %v1569
    %v1571 = vpop.f32.mrb[0].mxu0
    %v1572 = vadd.f32 %v1529, %v1571
    %v1573 = vpop.f32.mrb[0].mxu0
    %v1574 = vadd.f32 %v1531, %v1573
    %v1575 = vpop.f32.mrb[0].mxu0
    %v1576 = vadd.f32 %v1533, %v1575
    %1577 = vdwg.mxu0
    %1578 = vmatprep.subr.bf16.mxu0 %v1194
    %1579 = vmatpush1.bf16.msra.mxu0 %v1193
    %1580 = vmatprep.subr.bf16.mxu0 %v1198
    %1581 = vmatpush1.bf16.msra.mxu0 %v1197
    %1582 = vmatprep.subr.bf16.mxu0 %v1202
    %1583 = vmatpush1.bf16.msra.mxu0 %v1201
    %1584 = vmatprep.subr.bf16.mxu0 %v1206
    %1585 = vmatpush1.bf16.msra.mxu0 %v1205
    %1586 = vmatprep.subr.bf16.mxu0 %v1210
    %1587 = vmatpush1.bf16.msra.mxu0 %v1209
    %1588 = vmatprep.subr.bf16.mxu0 %v1214
    %1589 = vmatpush1.bf16.msra.mxu0 %v1213
    %1590 = vmatprep.subr.bf16.mxu0 %v1218
    %1591 = vmatpush1.bf16.msra.mxu0 %v1217
    %1592 = vmatprep.subr.bf16.mxu0 %v1222
    %1593 = vmatpush1.bf16.msra.mxu0 %v1221
    %1594 = vmatprep.subr.bf16.mxu0 0
    %1595 = vmatpush1.bf16.msra.mxu0 0
    %1596 = vmatprep.subr.bf16.mxu0 0
    %1597 = vmatpush1.bf16.msra.mxu0 0
    %1598 = vmatprep.subr.bf16.mxu0 0
    %1599 = vmatpush1.bf16.msra.mxu0 0
    %1600 = vmatprep.subr.bf16.mxu0 0
    %1601 = vmatpush1.bf16.msra.mxu0 0
    %1602 = vmatprep.subr.bf16.mxu0 0
    %1603 = vmatpush1.bf16.msra.mxu0 0
    %1604 = vmatprep.subr.bf16.mxu0 0
    %1605 = vmatpush1.bf16.msra.mxu0 0
    %1606 = vmatprep.subr.bf16.mxu0 0
    %1607 = vmatpush1.bf16.msra.mxu0 0
    %1608 = vmatprep.subr.bf16.mxu0 0
    %1609 = vmatpush1.bf16.msra.mxu0 0
    %1610 = vmatprep.mubr.bf16.mxu0 0
    %1611 = vmatmul.mubr.bf16.gmra.mrb[0].mxu0 %v321
    %v1612 = vpop.f32.mrb[0].mxu0
    %v1613 = vadd.f32 %v1570, %v1612
    %v1614 = vpop.f32.mrb[0].mxu0
    %v1615 = vadd.f32 %v1572, %v1614
    %v1616 = vpop.f32.mrb[0].mxu0
    %v1617 = vadd.f32 %v1574, %v1616
    %v1618 = vpop.f32.mrb[0].mxu0
    %v1619 = vadd.f32 %v1576, %v1618
    %1620 = vdwg.mxu0
    %1621 = vmatprep.subr.bf16.mxu0 %v1004
    %1622 = vmatpush1.bf16.msra.mxu0 %v1003
    %1623 = vmatprep.subr.bf16.mxu0 %v1008
    %1624 = vmatpush1.bf16.msra.mxu0 %v1007
    %1625 = vmatprep.subr.bf16.mxu0 %v1012
    %1626 = vmatpush1.bf16.msra.mxu0 %v1011
    %1627 = vmatprep.subr.bf16.mxu0 %v1016
    %1628 = vmatpush1.bf16.msra.mxu0 %v1015
    %1629 = vmatprep.subr.bf16.mxu0 %v1020
    %1630 = vmatpush1.bf16.msra.mxu0 %v1019
    %1631 = vmatprep.subr.bf16.mxu0 %v1024
    %1632 = vmatpush1.bf16.msra.mxu0 %v1023
    %1633 = vmatprep.subr.bf16.mxu0 %v1028
    %1634 = vmatpush1.bf16.msra.mxu0 %v1027
    %1635 = vmatprep.subr.bf16.mxu0 %v1032
    %1636 = vmatpush1.bf16.msra.mxu0 %v1031
    %1637 = vmatprep.subr.bf16.mxu0 %v1036
    %1638 = vmatpush1.bf16.msra.mxu0 %v1035
    %1639 = vmatprep.subr.bf16.mxu0 %v1040
    %1640 = vmatpush1.bf16.msra.mxu0 %v1039
    %1641 = vmatprep.subr.bf16.mxu0 %v1044
    %1642 = vmatpush1.bf16.msra.mxu0 %v1043
    %1643 = vmatprep.subr.bf16.mxu0 %v1048
    %1644 = vmatpush1.bf16.msra.mxu0 %v1047
    %1645 = vmatprep.subr.bf16.mxu0 %v1052
    %1646 = vmatpush1.bf16.msra.mxu0 %v1051
    %1647 = vmatprep.subr.bf16.mxu0 %v1056
    %1648 = vmatpush1.bf16.msra.mxu0 %v1055
    %1649 = vmatprep.subr.bf16.mxu0 %v1060
    %1650 = vmatpush1.bf16.msra.mxu0 %v1059
    %1651 = vmatprep.subr.bf16.mxu0 %v1064
    %1652 = vmatpush1.bf16.msra.mxu0 %v1063
    %1653 = vmatprep.mubr.bf16.mxu0 %v316
    %1654 = vmatmul.mubr.bf16.gmra.mrb[0].mxu0 %v315
    %v1655 = vpop.f32.mrb[0].mxu0
    %v1656 = vadd.f32 0.0, %v1655
    %v1657 = vpop.f32.mrb[0].mxu0
    %v1658 = vadd.f32 0.0, %v1657
    %v1659 = vpop.f32.mrb[0].mxu0
    %v1660 = vadd.f32 0.0, %v1659
    %v1661 = vpop.f32.mrb[0].mxu0
    %v1662 = vadd.f32 0.0, %v1661
    %1663 = vdwg.mxu0
    %1664 = vmatprep.subr.bf16.mxu0 %v1068
    %1665 = vmatpush1.bf16.msra.mxu0 %v1067
    %1666 = vmatprep.subr.bf16.mxu0 %v1072
    %1667 = vmatpush1.bf16.msra.mxu0 %v1071
    %1668 = vmatprep.subr.bf16.mxu0 %v1076
    %1669 = vmatpush1.bf16.msra.mxu0 %v1075
    %1670 = vmatprep.subr.bf16.mxu0 %v1080
    %1671 = vmatpush1.bf16.msra.mxu0 %v1079
    %1672 = vmatprep.subr.bf16.mxu0 %v1084
    %1673 = vmatpush1.bf16.msra.mxu0 %v1083
    %1674 = vmatprep.subr.bf16.mxu0 %v1088
    %1675 = vmatpush1.bf16.msra.mxu0 %v1087
    %1676 = vmatprep.subr.bf16.mxu0 %v1092
    %1677 = vmatpush1.bf16.msra.mxu0 %v1091
    %1678 = vmatprep.subr.bf16.mxu0 %v1096
    %1679 = vmatpush1.bf16.msra.mxu0 %v1095
    %1680 = vmatprep.subr.bf16.mxu0 %v1100
    %1681 = vmatpush1.bf16.msra.mxu0 %v1099
    %1682 = vmatprep.subr.bf16.mxu0 %v1104
    %1683 = vmatpush1.bf16.msra.mxu0 %v1103
    %1684 = vmatprep.subr.bf16.mxu0 %v1108
    %1685 = vmatpush1.bf16.msra.mxu0 %v1107
    %1686 = vmatprep.subr.bf16.mxu0 %v1112
    %1687 = vmatpush1.bf16.msra.mxu0 %v1111
    %1688 = vmatprep.subr.bf16.mxu0 %v1116
    %1689 = vmatpush1.bf16.msra.mxu0 %v1115
    %1690 = vmatprep.subr.bf16.mxu0 %v1120
    %1691 = vmatpush1.bf16.msra.mxu0 %v1119
    %1692 = vmatprep.subr.bf16.mxu0 %v1124
    %1693 = vmatpush1.bf16.msra.mxu0 %v1123
    %1694 = vmatprep.subr.bf16.mxu0 %v1128
    %1695 = vmatpush1.bf16.msra.mxu0 %v1127
    %1696 = vmatprep.mubr.bf16.mxu0 %v318
    %1697 = vmatmul.mubr.bf16.gmra.mrb[0].mxu0 %v317
    %v1698 = vpop.f32.mrb[0].mxu0
    %v1699 = vadd.f32 %v1656, %v1698
    %v1700 = vpop.f32.mrb[0].mxu0
    %v1701 = vadd.f32 %v1658, %v1700
    %v1702 = vpop.f32.mrb[0].mxu0
    %v1703 = vadd.f32 %v1660, %v1702
    %v1704 = vpop.f32.mrb[0].mxu0
    %v1705 = vadd.f32 %v1662, %v1704
    %1706 = vdwg.mxu0
    %1707 = vmatprep.subr.bf16.mxu0 %v1132
    %1708 = vmatpush1.bf16.msra.mxu0 %v1131
    %1709 = vmatprep.subr.bf16.mxu0 %v1136
    %1710 = vmatpush1.bf16.msra.mxu0 %v1135
    %1711 = vmatprep.subr.bf16.mxu0 %v1140
    %1712 = vmatpush1.bf16.msra.mxu0 %v1139
    %1713 = vmatprep.subr.bf16.mxu0 %v1144
    %1714 = vmatpush1.bf16.msra.mxu0 %v1143
    %1715 = vmatprep.subr.bf16.mxu0 %v1148
    %1716 = vmatpush1.bf16.msra.mxu0 %v1147
    %1717 = vmatprep.subr.bf16.mxu0 %v1152
    %1718 = vmatpush1.bf16.msra.mxu0 %v1151
    %1719 = vmatprep.subr.bf16.mxu0 %v1156
    %1720 = vmatpush1.bf16.msra.mxu0 %v1155
    %1721 = vmatprep.subr.bf16.mxu0 %v1160
    %1722 = vmatpush1.bf16.msra.mxu0 %v1159
    %1723 = vmatprep.subr.bf16.mxu0 %v1164
    %1724 = vmatpush1.bf16.msra.mxu0 %v1163
    %1725 = vmatprep.subr.bf16.mxu0 %v1168
    %1726 = vmatpush1.bf16.msra.mxu0 %v1167
    %1727 = vmatprep.subr.bf16.mxu0 %v1172
    %1728 = vmatpush1.bf16.msra.mxu0 %v1171
    %1729 = vmatprep.subr.bf16.mxu0 %v1176
    %1730 = vmatpush1.bf16.msra.mxu0 %v1175
    %1731 = vmatprep.subr.bf16.mxu0 %v1180
    %1732 = vmatpush1.bf16.msra.mxu0 %v1179
    %1733 = vmatprep.subr.bf16.mxu0 %v1184
    %1734 = vmatpush1.bf16.msra.mxu0 %v1183
    %1735 = vmatprep.subr.bf16.mxu0 %v1188
    %1736 = vmatpush1.bf16.msra.mxu0 %v1187
    %1737 = vmatprep.subr.bf16.mxu0 %v1192
    %1738 = vmatpush1.bf16.msra.mxu0 %v1191
    %1739 = vmatprep.mubr.bf16.mxu0 %v320
    %1740 = vmatmul.mubr.bf16.gmra.mrb[0].mxu0 %v319
    %v1741 = vpop.f32.mrb[0].mxu0
    %v1742 = vadd.f32 %v1699, %v1741
    %v1743 = vpop.f32.mrb[0].mxu0
    %v1744 = vadd.f32 %v1701, %v1743
    %v1745 = vpop.f32.mrb[0].mxu0
    %v1746 = vadd.f32 %v1703, %v1745
    %v1747 = vpop.f32.mrb[0].mxu0
    %v1748 = vadd.f32 %v1705, %v1747
    %1749 = vdwg.mxu0
    %1750 = vmatprep.subr.bf16.mxu0 %v1196
    %1751 = vmatpush1.bf16.msra.mxu0 %v1195
    %1752 = vmatprep.subr.bf16.mxu0 %v1200
    %1753 = vmatpush1.bf16.msra.mxu0 %v1199
    %1754 = vmatprep.subr.bf16.mxu0 %v1204
    %1755 = vmatpush1.bf16.msra.mxu0 %v1203
    %1756 = vmatprep.subr.bf16.mxu0 %v1208
    %1757 = vmatpush1.bf16.msra.mxu0 %v1207
    %1758 = vmatprep.subr.bf16.mxu0 %v1212
    %1759 = vmatpush1.bf16.msra.mxu0 %v1211
    %1760 = vmatprep.subr.bf16.mxu0 %v1216
    %1761 = vmatpush1.bf16.msra.mxu0 %v1215
    %1762 = vmatprep.subr.bf16.mxu0 %v1220
    %1763 = vmatpush1.bf16.msra.mxu0 %v1219
    %1764 = vmatprep.subr.bf16.mxu0 %v1224
    %1765 = vmatpush1.bf16.msra.mxu0 %v1223
    %1766 = vmatprep.subr.bf16.mxu0 0
    %1767 = vmatpush1.bf16.msra.mxu0 0
    %1768 = vmatprep.subr.bf16.mxu0 0
    %1769 = vmatpush1.bf16.msra.mxu0 0
    %1770 = vmatprep.subr.bf16.mxu0 0
    %1771 = vmatpush1.bf16.msra.mxu0 0
    %1772 = vmatprep.subr.bf16.mxu0 0
    %1773 = vmatpush1.bf16.msra.mxu0 0
    %1774 = vmatprep.subr.bf16.mxu0 0
    %1775 = vmatpush1.bf16.msra.mxu0 0
    %1776 = vmatprep.subr.bf16.mxu0 0
    %1777 = vmatpush1.bf16.msra.mxu0 0
    %1778 = vmatprep.subr.bf16.mxu0 0
    %1779 = vmatpush1.bf16.msra.mxu0 0
    %1780 = vmatprep.subr.bf16.mxu0 0
    %1781 = vmatpush1.bf16.msra.mxu0 0
    %1782 = vmatprep.mubr.bf16.mxu0 0
    %1783 = vmatmul.mubr.bf16.gmra.mrb[0].mxu0 %v321
    %v1784 = vpop.f32.mrb[0].mxu0
    %v1785 = vadd.f32 %v1742, %v1784
    %v1786 = vpop.f32.mrb[0].mxu0
    %v1787 = vadd.f32 %v1744, %v1786
    %v1788 = vpop.f32.mrb[0].mxu0
    %v1789 = vadd.f32 %v1746, %v1788
    %v1790 = vpop.f32.mrb[0].mxu0
    %v1791 = vadd.f32 %v1748, %v1790
    %1792 = vdwg.mxu0
    %v1793 = vpack.c.bf16 %v1617, %v1613
    %v1794 = vpack.c.bf16 %v1619, %v1615
    %v1795 = vpack.c.bf16 %v1789, %v1785
    %v1796 = vpack.c.bf16 %v1791, %v1787
    %v1801 = vunpack.c.l.b16 %v1793
    %v1802 = vunpack.c.l.b16 %v1794
    %v1803 = vunpack.c.l.b16 %v1795
    %v1804 = vunpack.c.l.b16 %v1796
    %v1805 = vunpack.c.h.b16 %v1793
    %v1806 = vunpack.c.h.b16 %v1794
    %v1807 = vunpack.c.h.b16 %v1795
    %v1808 = vunpack.c.h.b16 %v1796
    %v1809 = vpack.c.b16 %v1802, %v1801
    %v1810 = vpack.c.b16 %v1804, %v1803
    %v1811 = vpack.c.b16 %v1806, %v1805
    %v1812 = vpack.c.b16 %v1808, %v1807
    %1817 = vst [vmem:[#allocation9] sm:$0xff] %v1809
    %1818 = vst [vmem:[#allocation9 + $0x8] sm:$0xff] %v1810
    %1819 = vst [vmem:[#allocation9 + $0x10] sm:$0xff] %v1811
    %1820 = vst [vmem:[#allocation9 + $0x18] sm:$0xff] %v1812
    %p1821 = scmp.lt.s32.totalorder 0, 0
    // Predicated region
    $region30: #{tpu_custom_call.1} parent=1 // pred_check
      %p1822 = pneg %p1821
    $region31: #{tpu_custom_call.1} parent=1 // pred_check_branch
      %1824 = sbr.rel (%p1822) target = $region33
    $region32: #{tpu_custom_call.1} parent=1 // pred_region
      %v1825 = vld [vmem:[#allocation2] sm:$0xf]
      %vm1826 = vcmask 130048
      %v1828 = vsel %vm1826, 1.0, 0
      %1830 = vmatprep.subr.mxu0 %v1615
      %1831 = vmatpush1.msra.mxu0 %v1613
      %1832 = vmatprep.subr.mxu0 %v1619
      %1833 = vmatpush1.msra.mxu0 %v1617
      %1834 = vmatprep.subr.mxu0 0.0
      %1835 = vmatpush1.msra.mxu0 0.0
      %1836 = vmatprep.subr.mxu0 0.0
      %1837 = vmatpush1.msra.mxu0 0.0
      %1838 = vmatprep.subr.mxu0 0.0
      %1839 = vmatpush1.msra.mxu0 0.0
      %1840 = vmatprep.subr.mxu0 0.0
      %1841 = vmatpush1.msra.mxu0 0.0
      %1842 = vmatprep.subr.mxu0 0.0
      %1843 = vmatpush1.msra.mxu0 0.0
      %1844 = vmatprep.subr.mxu0 0.0
      %1845 = vmatpush1.msra.mxu0 0.0
      %1846 = vmatprep.subr.mxu0 0.0
      %1847 = vmatpush1.msra.mxu0 0.0
      %1848 = vmatprep.subr.mxu0 0.0
      %1849 = vmatpush1.msra.mxu0 0.0
      %1850 = vmatprep.subr.mxu0 0.0
      %1851 = vmatpush1.msra.mxu0 0.0
      %1852 = vmatprep.subr.mxu0 0.0
      %1853 = vmatpush1.msra.mxu0 0.0
      %1854 = vmatprep.subr.mxu0 0.0
      %1855 = vmatpush1.msra.mxu0 0.0
      %1856 = vmatprep.subr.mxu0 0.0
      %1857 = vmatpush1.msra.mxu0 0.0
      %1858 = vmatprep.subr.mxu0 0.0
      %1859 = vmatpush1.msra.mxu0 0.0
      %1860 = vmatprep.subr.mxu0 0.0
      %1861 = vmatpush1.msra.mxu0 0.0
      %1862 = vmatprep.subr.mxu0 0.0
      %1863 = vmatpush1.msra.mxu0 0.0
      %1864 = vmatprep.subr.mxu0 0.0
      %1865 = vmatpush1.msra.mxu0 0.0
      %1866 = vmatprep.subr.mxu0 0.0
      %1867 = vmatpush1.msra.mxu0 0.0
      %1868 = vmatprep.subr.mxu0 0.0
      %1869 = vmatpush1.msra.mxu0 0.0
      %1870 = vmatprep.subr.mxu0 0.0
      %1871 = vmatpush1.msra.mxu0 0.0
      %1872 = vmatprep.subr.mxu0 0.0
      %1873 = vmatpush1.msra.mxu0 0.0
      %1874 = vmatprep.subr.mxu0 0.0
      %1875 = vmatpush1.msra.mxu0 0.0
      %1876 = vmatprep.subr.mxu0 0.0
      %1877 = vmatpush1.msra.mxu0 0.0
      %1878 = vmatprep.subr.mxu0 0.0
      %1879 = vmatpush1.msra.mxu0 0.0
      %1880 = vmatprep.subr.mxu0 0.0
      %1881 = vmatpush1.msra.mxu0 0.0
      %1882 = vmatprep.subr.mxu0 0.0
      %1883 = vmatpush1.msra.mxu0 0.0
      %1884 = vmatprep.subr.mxu0 0.0
      %1885 = vmatpush1.msra.mxu0 0.0
      %1886 = vmatprep.subr.mxu0 0.0
      %1887 = vmatpush1.msra.mxu0 0.0
      %1888 = vmatprep.subr.mxu0 0.0
      %1889 = vmatpush1.msra.mxu0 0.0
      %1890 = vmatprep.subr.mxu0 0.0
      %1891 = vmatpush1.msra.mxu0 0.0
      %1892 = vmatprep.subr.mxu0 0.0
      %1893 = vmatpush1.msra.mxu0 0.0
      %1894 = vmatprep.mubr.f32.mxu0 0.0
      %1895 = vmatmul.mubr.f32.gmra.mrb[0].mxu0 %v1828
      %v1896 = vpop.f32.mrb[0].mxu0
      %v1897 = vadd.f32 0.0, %v1896
      %v1898 = vpop.f32.mrb[0].mxu0
      %v1899 = vadd.f32 0.0, %v1898
      %1900 = vdwg.mxu0
      %1901 = vmatprep.subr.mxu0 %v1787
      %1902 = vmatpush1.msra.mxu0 %v1785
      %1903 = vmatprep.subr.mxu0 %v1791
      %1904 = vmatpush1.msra.mxu0 %v1789
      %1905 = vmatprep.subr.mxu0 0.0
      %1906 = vmatpush1.msra.mxu0 0.0
      %1907 = vmatprep.subr.mxu0 0.0
      %1908 = vmatpush1.msra.mxu0 0.0
      %1909 = vmatprep.subr.mxu0 0.0
      %1910 = vmatpush1.msra.mxu0 0.0
      %1911 = vmatprep.subr.mxu0 0.0
      %1912 = vmatpush1.msra.mxu0 0.0
      %1913 = vmatprep.subr.mxu0 0.0
      %1914 = vmatpush1.msra.mxu0 0.0
      %1915 = vmatprep.subr.mxu0 0.0
      %1916 = vmatpush1.msra.mxu0 0.0
      %1917 = vmatprep.subr.mxu0 0.0
      %1918 = vmatpush1.msra.mxu0 0.0
      %1919 = vmatprep.subr.mxu0 0.0
      %1920 = vmatpush1.msra.mxu0 0.0
      %1921 = vmatprep.subr.mxu0 0.0
      %1922 = vmatpush1.msra.mxu0 0.0
      %1923 = vmatprep.subr.mxu0 0.0
      %1924 = vmatpush1.msra.mxu0 0.0
      %1925 = vmatprep.subr.mxu0 0.0
      %1926 = vmatpush1.msra.mxu0 0.0
      %1927 = vmatprep.subr.mxu0 0.0
      %1928 = vmatpush1.msra.mxu0 0.0
      %1929 = vmatprep.subr.mxu0 0.0
      %1930 = vmatpush1.msra.mxu0 0.0
      %1931 = vmatprep.subr.mxu0 0.0
      %1932 = vmatpush1.msra.mxu0 0.0
      %1933 = vmatprep.subr.mxu0 0.0
      %1934 = vmatpush1.msra.mxu0 0.0
      %1935 = vmatprep.subr.mxu0 0.0
      %1936 = vmatpush1.msra.mxu0 0.0
      %1937 = vmatprep.subr.mxu0 0.0
      %1938 = vmatpush1.msra.mxu0 0.0
      %1939 = vmatprep.subr.mxu0 0.0
      %1940 = vmatpush1.msra.mxu0 0.0
      %1941 = vmatprep.subr.mxu0 0.0
      %1942 = vmatpush1.msra.mxu0 0.0
      %1943 = vmatprep.subr.mxu0 0.0
      %1944 = vmatpush1.msra.mxu0 0.0
      %1945 = vmatprep.subr.mxu0 0.0
      %1946 = vmatpush1.msra.mxu0 0.0
      %1947 = vmatprep.subr.mxu0 0.0
      %1948 = vmatpush1.msra.mxu0 0.0
      %1949 = vmatprep.subr.mxu0 0.0
      %1950 = vmatpush1.msra.mxu0 0.0
      %1951 = vmatprep.subr.mxu0 0.0
      %1952 = vmatpush1.msra.mxu0 0.0
      %1953 = vmatprep.subr.mxu0 0.0
      %1954 = vmatpush1.msra.mxu0 0.0
      %1955 = vmatprep.subr.mxu0 0.0
      %1956 = vmatpush1.msra.mxu0 0.0
      %1957 = vmatprep.subr.mxu0 0.0
      %1958 = vmatpush1.msra.mxu0 0.0
      %1959 = vmatprep.subr.mxu0 0.0
      %1960 = vmatpush1.msra.mxu0 0.0
      %1961 = vmatprep.subr.mxu0 0.0
      %1962 = vmatpush1.msra.mxu0 0.0
      %1963 = vmatprep.subr.mxu0 0.0
      %1964 = vmatpush1.msra.mxu0 0.0
      %1965 = vmatprep.mubr.f32.mxu0 0.0
      %1966 = vmatmul.mubr.f32.gmra.mrb[0].mxu0 %v1828
      %v1967 = vpop.f32.mrb[0].mxu0
      %v1968 = vadd.f32 0.0, %v1967
      %v1969 = vpop.f32.mrb[0].mxu0
      %v1970 = vadd.f32 0.0, %v1969
      %1971 = vdwg.mxu0
      %v1976 = vcombine.low %v1897, %v1899
      %v1977 = vcombine.low %v1968, %v1970
      %v1979 = vunpack.c.l.s4 1966171168
      %v1980 = vunpack.c.0.s8 %v1979
      %v1981 = vlaneseq
      %v1982 = vshrl.u32 %v1981, 7
      %v1983 = vsub.s32 %v1980, %v1982
      %v1984 = vrot.slane %v1976, %v1983
      %v1986 = vunpack.c.l.s4 1966171168
      %v1987 = vunpack.c.0.s8 %v1986
      %v1988 = vlaneseq
      %v1989 = vshrl.u32 %v1988, 7
      %v1990 = vsub.s32 %v1987, %v1989
      %v1991 = vrot.slane %v1977, %v1990
      %v1992 = vcombine.low %v1984, %v1991
      %v1994 = vunpack.c.l.s4 1966171168
      %v1995 = vunpack.c.0.s8 %v1994
      %v1996 = vlaneseq
      %v1997 = vshrl.u32 %v1996, 7
      %v1998 = vsub.s32 %v1995, %v1997
      %v1999 = vrot.slane %v1992, %v1998
      %v2001 = vadd.f32 %v1825, %v1999
      %v2002 = vlaneseq
      %vm2003 = vcmp.ge.s32.totalorder %v2002, 0
      %vm2004 = vcmp.lt.s32.totalorder %v2002, 512
      %vm2005 = vmand %vm2003, %vm2004
      %2006 = vst.msk [vmem:[#allocation2] sm:$0xf] %vm2005, %v2001
      %v2007 = vld [vmem:[#allocation3] sm:$0xf]
      %v2008 = vmul.f32 %v1613, %v1613
      %v2009 = vmul.f32 %v1615, %v1615
      %v2010 = vmul.f32 %v1785, %v1785
      %v2011 = vmul.f32 %v1787, %v1787
      %v2012 = vmul.f32 %v1617, %v1617
      %v2013 = vmul.f32 %v1619, %v1619
      %v2014 = vmul.f32 %v1789, %v1789
      %v2015 = vmul.f32 %v1791, %v1791
      %v2016 = vadd.f32 %v2008, %v2012
      %v2017 = vrot.slane %v2016, 4
      %v2018 = vadd.f32 %v2016, %v2017
      %v2019 = vrot.slane %v2018, 2
      %v2020 = vadd.f32 %v2018, %v2019
      %v2021 = vrot.slane %v2020, 1
      %v2022 = vadd.f32 %v2020, %v2021
      %v2023 = vadd.f32 %v2009, %v2013
      %v2024 = vrot.slane %v2023, 4
      %v2025 = vadd.f32 %v2023, %v2024
      %v2026 = vrot.slane %v2025, 2
      %v2027 = vadd.f32 %v2025, %v2026
      %v2028 = vrot.slane %v2027, 1
      %v2029 = vadd.f32 %v2027, %v2028
      %v2030 = vadd.f32 %v2010, %v2014
      %v2031 = vrot.slane %v2030, 4
      %v2032 = vadd.f32 %v2030, %v2031
      %v2033 = vrot.slane %v2032, 2
      %v2034 = vadd.f32 %v2032, %v2033
      %v2035 = vrot.slane %v2034, 1
      %v2036 = vadd.f32 %v2034, %v2035
      %v2037 = vadd.f32 %v2011, %v2015
      %v2038 = vrot.slane %v2037, 4
      %v2039 = vadd.f32 %v2037, %v2038
      %v2040 = vrot.slane %v2039, 2
      %v2041 = vadd.f32 %v2039, %v2040
      %v2042 = vrot.slane %v2041, 1
      %v2043 = vadd.f32 %v2041, %v2042
      %v2048 = vcombine.low %v2022, %v2029
      %v2049 = vcombine.low %v2036, %v2043
      %v2051 = vunpack.c.l.s4 1966171168
      %v2052 = vunpack.c.0.s8 %v2051
      %v2053 = vlaneseq
      %v2054 = vshrl.u32 %v2053, 7
      %v2055 = vsub.s32 %v2052, %v2054
      %v2056 = vrot.slane %v2048, %v2055
      %v2058 = vunpack.c.l.s4 1966171168
      %v2059 = vunpack.c.0.s8 %v2058
      %v2060 = vlaneseq
      %v2061 = vshrl.u32 %v2060, 7
      %v2062 = vsub.s32 %v2059, %v2061
      %v2063 = vrot.slane %v2049, %v2062
      %v2064 = vcombine.low %v2056, %v2063
      %v2066 = vunpack.c.l.s4 1966171168
      %v2067 = vunpack.c.0.s8 %v2066
      %v2068 = vlaneseq
      %v2069 = vshrl.u32 %v2068, 7
      %v2070 = vsub.s32 %v2067, %v2069
      %v2071 = vrot.slane %v2064, %v2070
      %v2073 = vadd.f32 %v2007, %v2071
      %2074 = vst.msk [vmem:[#allocation3] sm:$0xf] %vm2005, %v2073
    $region33: #{tpu_custom_call.1} parent=1 // pred_fallthru
      _
    // Predicated region
    $region34: #{tpu_custom_call.1} parent=1 // pred_check
      %p2075 = pneg %p59
    $region35: #{tpu_custom_call.1} parent=1 // pred_check_branch
      %2077 = sbr.rel (%p2075) target = $region37
    $region36: #{tpu_custom_call.1} parent=1 // pred_region
      %v2078 = vlaneseq
      %v2079 = vshrl.u32 %v2078, 7
      %v2080 = vadd.s32 %v2079, 8
      %s2081 = smul.u32 0, 16
      %v2082 = vstv %s2081
      %v2083 = vadd.s32 %v2079, %v2082
      %v2084 = vadd.s32 %v2080, %v2082
      %vm2085 = vcmp.lt.s32.totalorder %v2083, 8
      %vm2086 = vcmp.lt.s32.totalorder %v2084, 8
      %v2087 = vsel %vm2085, 1, 0
      %v2088 = vsel %vm2086, 1, 0
      %vm2089 = vcmp.eq.s32.totalorder %v2087, 1
      %vm2090 = vcmp.eq.s32.totalorder %v2088, 1
      %v2091 = vsel %vm2089, %v1613, 0.0
      %v2092 = vsel %vm2089, %v1615, 0.0
      %v2093 = vsel %vm2089, %v1785, 0.0
      %v2094 = vsel %vm2089, %v1787, 0.0
      %v2095 = vsel %vm2090, %v1617, 0.0
      %v2096 = vsel %vm2090, %v1619, 0.0
      %v2097 = vsel %vm2090, %v1789, 0.0
      %v2098 = vsel %vm2090, %v1791, 0.0
      %v2099 = vld [vmem:[#allocation2] sm:$0xf]
      %vm2100 = vcmask 130048
      %v2102 = vsel %vm2100, 1.0, 0
      %2104 = vmatprep.subr.mxu0 %v2092
      %2105 = vmatpush1.msra.mxu0 %v2091
      %2106 = vmatprep.subr.mxu0 %v2096
      %2107 = vmatpush1.msra.mxu0 %v2095
      %2108 = vmatprep.subr.mxu0 0.0
      %2109 = vmatpush1.msra.mxu0 0.0
      %2110 = vmatprep.subr.mxu0 0.0
      %2111 = vmatpush1.msra.mxu0 0.0
      %2112 = vmatprep.subr.mxu0 0.0
      %2113 = vmatpush1.msra.mxu0 0.0
      %2114 = vmatprep.subr.mxu0 0.0
      %2115 = vmatpush1.msra.mxu0 0.0
      %2116 = vmatprep.subr.mxu0 0.0
      %2117 = vmatpush1.msra.mxu0 0.0
      %2118 = vmatprep.subr.mxu0 0.0
      %2119 = vmatpush1.msra.mxu0 0.0
      %2120 = vmatprep.subr.mxu0 0.0
      %2121 = vmatpush1.msra.mxu0 0.0
      %2122 = vmatprep.subr.mxu0 0.0
      %2123 = vmatpush1.msra.mxu0 0.0
      %2124 = vmatprep.subr.mxu0 0.0
      %2125 = vmatpush1.msra.mxu0 0.0
      %2126 = vmatprep.subr.mxu0 0.0
      %2127 = vmatpush1.msra.mxu0 0.0
      %2128 = vmatprep.subr.mxu0 0.0
      %2129 = vmatpush1.msra.mxu0 0.0
      %2130 = vmatprep.subr.mxu0 0.0
      %2131 = vmatpush1.msra.mxu0 0.0
      %2132 = vmatprep.subr.mxu0 0.0
      %2133 = vmatpush1.msra.mxu0 0.0
      %2134 = vmatprep.subr.mxu0 0.0
      %2135 = vmatpush1.msra.mxu0 0.0
      %2136 = vmatprep.subr.mxu0 0.0
      %2137 = vmatpush1.msra.mxu0 0.0
      %2138 = vmatprep.subr.mxu0 0.0
      %2139 = vmatpush1.msra.mxu0 0.0
      %2140 = vmatprep.subr.mxu0 0.0
      %2141 = vmatpush1.msra.mxu0 0.0
      %2142 = vmatprep.subr.mxu0 0.0
      %2143 = vmatpush1.msra.mxu0 0.0
      %2144 = vmatprep.subr.mxu0 0.0
      %2145 = vmatpush1.msra.mxu0 0.0
      %2146 = vmatprep.subr.mxu0 0.0
      %2147 = vmatpush1.msra.mxu0 0.0
      %2148 = vmatprep.subr.mxu0 0.0
      %2149 = vmatpush1.msra.mxu0 0.0
      %2150 = vmatprep.subr.mxu0 0.0
      %2151 = vmatpush1.msra.mxu0 0.0
      %2152 = vmatprep.subr.mxu0 0.0
      %2153 = vmatpush1.msra.mxu0 0.0
      %2154 = vmatprep.subr.mxu0 0.0
      %2155 = vmatpush1.msra.mxu0 0.0
      %2156 = vmatprep.subr.mxu0 0.0
      %2157 = vmatpush1.msra.mxu0 0.0
      %2158 = vmatprep.subr.mxu0 0.0
      %2159 = vmatpush1.msra.mxu0 0.0
      %2160 = vmatprep.subr.mxu0 0.0
      %2161 = vmatpush1.msra.mxu0 0.0
      %2162 = vmatprep.subr.mxu0 0.0
      %2163 = vmatpush1.msra.mxu0 0.0
      %2164 = vmatprep.subr.mxu0 0.0
      %2165 = vmatpush1.msra.mxu0 0.0
      %2166 = vmatprep.subr.mxu0 0.0
      %2167 = vmatpush1.msra.mxu0 0.0
      %2168 = vmatprep.mubr.f32.mxu0 0.0
      %2169 = vmatmul.mubr.f32.gmra.mrb[0].mxu0 %v2102
      %v2170 = vpop.f32.mrb[0].mxu0
      %v2171 = vadd.f32 0.0, %v2170
      %v2172 = vpop.f32.mrb[0].mxu0
      %v2173 = vadd.f32 0.0, %v2172
      %2174 = vdwg.mxu0
      %2175 = vmatprep.subr.mxu0 %v2094
      %2176 = vmatpush1.msra.mxu0 %v2093
      %2177 = vmatprep.subr.mxu0 %v2098
      %2178 = vmatpush1.msra.mxu0 %v2097
      %2179 = vmatprep.subr.mxu0 0.0
      %2180 = vmatpush1.msra.mxu0 0.0
      %2181 = vmatprep.subr.mxu0 0.0
      %2182 = vmatpush1.msra.mxu0 0.0
      %2183 = vmatprep.subr.mxu0 0.0
      %2184 = vmatpush1.msra.mxu0 0.0
      %2185 = vmatprep.subr.mxu0 0.0
      %2186 = vmatpush1.msra.mxu0 0.0
      %2187 = vmatprep.subr.mxu0 0.0
      %2188 = vmatpush1.msra.mxu0 0.0
      %2189 = vmatprep.subr.mxu0 0.0
      %2190 = vmatpush1.msra.mxu0 0.0
      %2191 = vmatprep.subr.mxu0 0.0
      %2192 = vmatpush1.msra.mxu0 0.0
      %2193 = vmatprep.subr.mxu0 0.0
      %2194 = vmatpush1.msra.mxu0 0.0
      %2195 = vmatprep.subr.mxu0 0.0
      %2196 = vmatpush1.msra.mxu0 0.0
      %2197 = vmatprep.subr.mxu0 0.0
      %2198 = vmatpush1.msra.mxu0 0.0
      %2199 = vmatprep.subr.mxu0 0.0
      %2200 = vmatpush1.msra.mxu0 0.0
      %2201 = vmatprep.subr.mxu0 0.0
      %2202 = vmatpush1.msra.mxu0 0.0
      %2203 = vmatprep.subr.mxu0 0.0
      %2204 = vmatpush1.msra.mxu0 0.0
      %2205 = vmatprep.subr.mxu0 0.0
      %2206 = vmatpush1.msra.mxu0 0.0
      %2207 = vmatprep.subr.mxu0 0.0
      %2208 = vmatpush1.msra.mxu0 0.0
      %2209 = vmatprep.subr.mxu0 0.0
      %2210 = vmatpush1.msra.mxu0 0.0
      %2211 = vmatprep.subr.mxu0 0.0
      %2212 = vmatpush1.msra.mxu0 0.0
      %2213 = vmatprep.subr.mxu0 0.0
      %2214 = vmatpush1.msra.mxu0 0.0
      %2215 = vmatprep.subr.mxu0 0.0
      %2216 = vmatpush1.msra.mxu0 0.0
      %2217 = vmatprep.subr.mxu0 0.0
      %2218 = vmatpush1.msra.mxu0 0.0
      %2219 = vmatprep.subr.mxu0 0.0
      %2220 = vmatpush1.msra.mxu0 0.0
      %2221 = vmatprep.subr.mxu0 0.0
      %2222 = vmatpush1.msra.mxu0 0.0
      %2223 = vmatprep.subr.mxu0 0.0
      %2224 = vmatpush1.msra.mxu0 0.0
      %2225 = vmatprep.subr.mxu0 0.0
      %2226 = vmatpush1.msra.mxu0 0.0
      %2227 = vmatprep.subr.mxu0 0.0
      %2228 = vmatpush1.msra.mxu0 0.0
      %2229 = vmatprep.subr.mxu0 0.0
      %2230 = vmatpush1.msra.mxu0 0.0
      %2231 = vmatprep.subr.mxu0 0.0
      %2232 = vmatpush1.msra.mxu0 0.0
      %2233 = vmatprep.subr.mxu0 0.0
      %2234 = vmatpush1.msra.mxu0 0.0
      %2235 = vmatprep.subr.mxu0 0.0
      %2236 = vmatpush1.msra.mxu0 0.0
      %2237 = vmatprep.subr.mxu0 0.0
      %2238 = vmatpush1.msra.mxu0 0.0
      %2239 = vmatprep.mubr.f32.mxu0 0.0
      %2240 = vmatmul.mubr.f32.gmra.mrb[0].mxu0 %v2102
      %v2241 = vpop.f32.mrb[0].mxu0
      %v2242 = vadd.f32 0.0, %v2241
      %v2243 = vpop.f32.mrb[0].mxu0
      %v2244 = vadd.f32 0.0, %v2243
      %2245 = vdwg.mxu0
      %v2250 = vcombine.low %v2171, %v2173
      %v2251 = vcombine.low %v2242, %v2244
      %v2253 = vunpack.c.l.s4 1966171168
      %v2254 = vunpack.c.0.s8 %v2253
      %v2255 = vlaneseq
      %v2256 = vshrl.u32 %v2255, 7
      %v2257 = vsub.s32 %v2254, %v2256
      %v2258 = vrot.slane %v2250, %v2257
      %v2260 = vunpack.c.l.s4 1966171168
      %v2261 = vunpack.c.0.s8 %v2260
      %v2262 = vlaneseq
      %v2263 = vshrl.u32 %v2262, 7
      %v2264 = vsub.s32 %v2261, %v2263
      %v2265 = vrot.slane %v2251, %v2264
      %v2266 = vcombine.low %v2258, %v2265
      %v2268 = vunpack.c.l.s4 1966171168
      %v2269 = vunpack.c.0.s8 %v2268
      %v2270 = vlaneseq
      %v2271 = vshrl.u32 %v2270, 7
      %v2272 = vsub.s32 %v2269, %v2271
      %v2273 = vrot.slane %v2266, %v2272
      %v2275 = vadd.f32 %v2099, %v2273
      %v2276 = vlaneseq
      %vm2277 = vcmp.ge.s32.totalorder %v2276, 0
      %vm2278 = vcmp.lt.s32.totalorder %v2276, 512
      %vm2279 = vmand %vm2277, %vm2278
      %2280 = vst.msk [vmem:[#allocation2] sm:$0xf] %vm2279, %v2275
      %v2281 = vld [vmem:[#allocation3] sm:$0xf]
      %v2282 = vmul.f32 %v2091, %v2091
      %v2283 = vmul.f32 %v2092, %v2092
      %v2284 = vmul.f32 %v2093, %v2093
      %v2285 = vmul.f32 %v2094, %v2094
      %v2286 = vmul.f32 %v2095, %v2095
      %v2287 = vmul.f32 %v2096, %v2096
      %v2288 = vmul.f32 %v2097, %v2097
      %v2289 = vmul.f32 %v2098, %v2098
      %v2290 = vadd.f32 %v2282, %v2286
      %v2291 = vrot.slane %v2290, 4
      %v2292 = vadd.f32 %v2290, %v2291
      %v2293 = vrot.slane %v2292, 2
      %v2294 = vadd.f32 %v2292, %v2293
      %v2295 = vrot.slane %v2294, 1
      %v2296 = vadd.f32 %v2294, %v2295
      %v2297 = vadd.f32 %v2283, %v2287
      %v2298 = vrot.slane %v2297, 4
      %v2299 = vadd.f32 %v2297, %v2298
      %v2300 = vrot.slane %v2299, 2
      %v2301 = vadd.f32 %v2299, %v2300
      %v2302 = vrot.slane %v2301, 1
      %v2303 = vadd.f32 %v2301, %v2302
      %v2304 = vadd.f32 %v2284, %v2288
      %v2305 = vrot.slane %v2304, 4
      %v2306 = vadd.f32 %v2304, %v2305
      %v2307 = vrot.slane %v2306, 2
      %v2308 = vadd.f32 %v2306, %v2307
      %v2309 = vrot.slane %v2308, 1
      %v2310 = vadd.f32 %v2308, %v2309
      %v2311 = vadd.f32 %v2285, %v2289
      %v2312 = vrot.slane %v2311, 4
      %v2313 = vadd.f32 %v2311, %v2312
      %v2314 = vrot.slane %v2313, 2
      %v2315 = vadd.f32 %v2313, %v2314
      %v2316 = vrot.slane %v2315, 1
      %v2317 = vadd.f32 %v2315, %v2316
      %v2322 = vcombine.low %v2296, %v2303
      %v2323 = vcombine.low %v2310, %v2317
      %v2325 = vunpack.c.l.s4 1966171168
      %v2326 = vunpack.c.0.s8 %v2325
      %v2327 = vlaneseq
      %v2328 = vshrl.u32 %v2327, 7
      %v2329 = vsub.s32 %v2326, %v2328
      %v2330 = vrot.slane %v2322, %v2329
      %v2332 = vunpack.c.l.s4 1966171168
      %v2333 = vunpack.c.0.s8 %v2332
      %v2334 = vlaneseq
      %v2335 = vshrl.u32 %v2334, 7
      %v2336 = vsub.s32 %v2333, %v2335
      %v2337 = vrot.slane %v2323, %v2336
      %v2338 = vcombine.low %v2330, %v2337
      %v2340 = vunpack.c.l.s4 1966171168
      %v2341 = vunpack.c.0.s8 %v2340
      %v2342 = vlaneseq
      %v2343 = vshrl.u32 %v2342, 7
      %v2344 = vsub.s32 %v2341, %v2343
      %v2345 = vrot.slane %v2338, %v2344
      %v2347 = vadd.f32 %v2281, %v2345
      %2348 = vst.msk [vmem:[#allocation3] sm:$0xf] %vm2279, %v2347
      %v2349 = vld [vmem:[#allocation2] sm:$0xf]
      %v2350 = vmul.f32 %v2349, 0.125
      %v2351 = vld [vmem:[#allocation3] sm:$0xf]
      %v2352 = vmul.f32 %v2351, 0.125
      %v2353 = vmul.f32 %v2350, %v2350
      %v2354 = vsub.f32 %v2352, %v2353
      %v2355 = vmax.f32 %v2354, 0.0
      %v2356 = vld [vmem:[%s2] sm:$0xf]
      %v2357 = vadd.f32 %v2355, 1e-05
      %v2358 = vrsqrt.pop %v2357
      %v2359 = vmul.f32 %v2356, %v2358
      %2360 = vst.msk [vmem:[#allocation10] sm:$0xf] %vm2279, %v2359
      %v2361 = vld [vmem:[%s3] sm:$0xf]
      %v2362 = vmul.f32 %v2350, %v2359
      %v2363 = vsub.f32 %v2361, %v2362
      %2364 = vst.msk [vmem:[#allocation12] sm:$0xf] %vm2279, %v2363
    $region37: #{tpu_custom_call.1} parent=1 // pred_fallthru
      _
    // Predicated region
    $region38: #{tpu_custom_call.1} parent=1 // pred_check
      _
    $region39: #{tpu_custom_call.1} parent=1 // pred_check_branch
      %2366 = sbr.rel (0) target = $region41
    $region40: #{tpu_custom_call.1} parent=1 // pred_region
      %s2368 = ssub.s32 512, 512
      %2369 = vsyncadd [#allocation6], %s2368
      %s2370 = sshll.u32 [#allocation9], 4
      %s2371 = int_to_ptr.vmem [resolvable:$true] %s2370
      %2376 = dma.vmem_to_hbm [thread:$0]  %s2371, 512, %s4, [#allocation6], 256, 256, 16
    $region41: #{tpu_custom_call.1} parent=1 // pred_fallthru
      _
    // Predicated region
    $region42: #{tpu_custom_call.1} parent=1 // pred_check
      _
    $region43: #{tpu_custom_call.1} parent=1 // pred_check_branch
      %2378 = sbr.rel (0) target = $region45
    $region44: #{tpu_custom_call.1} parent=1 // pred_region
      %s2380 = ssub.s32 64, 64
      %2381 = vsyncadd [#allocation11], %s2380
      %s2383 = sshll.u32 [#allocation10], 4
      %s2384 = int_to_ptr.vmem [resolvable:$true] %s2383
      %2386 = dma.vmem_to_hbm [thread:$0]  %s2384, 64, %s5, [#allocation11]
    $region45: #{tpu_custom_call.1} parent=1 // pred_fallthru
      _
    // Predicated region
    $region46: #{tpu_custom_call.1} parent=1 // pred_check
      _
    $region47: #{tpu_custom_call.1} parent=1 // pred_check_branch
      %2388 = sbr.rel (0) target = $region49
    $region48: #{tpu_custom_call.1} parent=1 // pred_region
      %s2390 = ssub.s32 64, 64
      %2391 = vsyncadd [#allocation11], %s2390
      %s2393 = sshll.u32 [#allocation12], 4
      %s2394 = int_to_ptr.vmem [resolvable:$true] %s2393
      %2396 = dma.vmem_to_hbm [thread:$0]  %s2394, 64, %s6, [#allocation11]
    $region49: #{tpu_custom_call.1} parent=1 // pred_fallthru
      _
    // Predicated region
    $region50: #{tpu_custom_call.1} parent=1 // pred_check
      _
    $region51: #{tpu_custom_call.1} parent=1 // pred_check_branch
      %2398 = sbr.rel (0) target = $region53
    $region52: #{tpu_custom_call.1} parent=1 // pred_region
      %2399 = dma.done [#allocation6], 512
    $region53: #{tpu_custom_call.1} parent=1 // pred_fallthru
      _
    // Predicated region
    $region54: #{tpu_custom_call.1} parent=1 // pred_check
      _
    $region55: #{tpu_custom_call.1} parent=1 // pred_check_branch
      %2401 = sbr.rel (0) target = $region57
    $region56: #{tpu_custom_call.1} parent=1 // pred_region
      %2402 = dma.done [#allocation11], 64
    $region57: #{tpu_custom_call.1} parent=1 // pred_fallthru
      _
    // Predicated region
    $region58: #{tpu_custom_call.1} parent=1 // pred_check
      _
    $region59: #{tpu_custom_call.1} parent=1 // pred_check_branch
      %2404 = sbr.rel (0) target = $region61
    $region60: #{tpu_custom_call.1} parent=1 // pred_region
      %2405 = dma.done [#allocation11], 64
    $region61: #{tpu_custom_call.1} parent=1 // pred_fallthru
      _
    %2406 = vsyncpa [#allocation5], 1
    %2407 = vsyncpa [#allocation8], 1
    %2408 = vsyncpa [#allocation6], 1
    %2409 = vsyncpa [#allocation11], 1

</llo_original>
